<compile_context>
chip_gen: v6e
topology: v6e:2x2x1
jax: 0.10.0
libtpu: 0.0.40
codegen_flags: <defaults>
</compile_context>

<pallas_src>
import functools

import jax
import jax.numpy as jnp
from jax.experimental import pallas as pl
from jax.experimental.pallas import tpu as pltpu

EPS = 1e-5          # PyTorch GroupNorm default eps
NUM_GROUPS = 32
LANE = 128


# ----------------------------- in-kernel helpers ---------------------------- #

def _shift2d(a, oy, ox):
    """b[i, j, :] = a[i + oy, j + ox, :] with zero fill outside bounds (static)."""
    H, W, C = a.shape
    if oy != 0:
        zrow = jnp.zeros((1, W, C), a.dtype)
        a = (jnp.concatenate([a[1:, :, :], zrow], axis=0) if oy == 1
             else jnp.concatenate([zrow, a[:-1, :, :]], axis=0))
    if ox != 0:
        zcol = jnp.zeros((H, 1, C), a.dtype)
        a = (jnp.concatenate([a[:, 1:, :], zcol], axis=1) if ox == 1
             else jnp.concatenate([zcol, a[:, :-1, :]], axis=1))
    return a


def _gn_silu_conv(x_f32, gamma, beta, rmat, smat, w_ref, n_per_group, cdtype):
    """GroupNorm(32) -> SiLU -> 3x3 conv (fused im2col) for one image.

    x_f32:  (H, W, Cpi) float32          gamma/beta: (1, Cpi) float32
    rmat:   (Cpi, G) group reduce        smat: (G, Cpi) group broadcast
    w_ref:  ref (9, Cpi, Cpo) compute dtype
    returns (HW, Cpo) float32 conv output (no bias).
    """
    H, W, Cpi = x_f32.shape
    HW = H * W
    x2 = x_f32.reshape(HW, Cpi)

    # --- GroupNorm statistics: two-pass (centered) variance, all f32 ---------
    ch_sum = jnp.sum(x2, axis=0, keepdims=True)                        # (1, Cpi)
    mean_g = jnp.dot(ch_sum, rmat, preferred_element_type=jnp.float32) / n_per_group
    mean_c = jnp.dot(mean_g, smat, preferred_element_type=jnp.float32)  # (1, Cpi)
    xc = x2 - mean_c
    ch_sq = jnp.sum(xc * xc, axis=0, keepdims=True)                    # (1, Cpi)
    var_g = jnp.dot(ch_sq, rmat, preferred_element_type=jnp.float32) / n_per_group
    inv_g = jax.lax.rsqrt(var_g + EPS)
    inv_c = jnp.dot(inv_g, smat, preferred_element_type=jnp.float32)   # (1, Cpi)

    y = xc * inv_c * gamma + beta
    act = (y * (1.0 / (1.0 + jnp.exp(-y)))).astype(cdtype)             # SiLU -> MXU dtype
    act3 = act.reshape(H, W, Cpi)

    # --- 3x3 conv as 9 shifted (HW, Cpi) @ (Cpi, Cpo) MXU matmuls (fused im2col)
    Cpo = w_ref.shape[-1]
    acc = jnp.zeros((HW, Cpo), jnp.float32)
    for k in range(9):
        oy, ox = k // 3 - 1, k % 3 - 1
        tap = _shift2d(act3, oy, ox).reshape(HW, Cpi)
        acc = acc + jnp.dot(tap, w_ref[k], preferred_element_type=jnp.float32)
    return acc


# ------------------------------- kernels ------------------------------------ #

def resblock_half1_kernel(x_ref, g_ref, b_ref, r_ref, s_ref, w_ref, bc_ref,
                          emb_ref, wp_ref, bp_ref, o_ref, *, n_per_group, cdtype):
    """GN1 + SiLU + conv1 + bias + Linear(emb) broadcast, one batch element."""
    x = x_ref[0].astype(jnp.float32)                                   # (H, W, Cpi)
    acc = _gn_silu_conv(x, g_ref[...], b_ref[...], r_ref[...], s_ref[...],
                        w_ref, n_per_group, cdtype) + bc_ref[...]
    eproj = jnp.dot(emb_ref[0].astype(cdtype), wp_ref[...],
                    preferred_element_type=jnp.float32) + bp_ref[...]  # (1, Cpo)
    o_ref[...] = (acc + eproj).reshape(o_ref.shape).astype(o_ref.dtype)


def resblock_half2_proj_kernel(h_ref, g_ref, b_ref, r_ref, s_ref, w_ref, bc_ref,
                               res_ref, ws_ref, bs_ref, o_ref, *, n_per_group, cdtype):
    """GN2 + SiLU + conv2 + bias + 1x1-conv shortcut, one batch element."""
    h = h_ref[0].astype(jnp.float32)
    acc = _gn_silu_conv(h, g_ref[...], b_ref[...], r_ref[...], s_ref[...],
                        w_ref, n_per_group, cdtype) + bc_ref[...]
    HW = h.shape[0] * h.shape[1]
    res = res_ref[0].astype(cdtype).reshape(HW, res_ref.shape[-1])
    sc = jnp.dot(res, ws_ref[...], preferred_element_type=jnp.float32) + bs_ref[...]
    o_ref[...] = (acc + sc).reshape(o_ref.shape).astype(o_ref.dtype)


def resblock_half2_id_kernel(h_ref, g_ref, b_ref, r_ref, s_ref, w_ref, bc_ref,
                             res_ref, o_ref, *, n_per_group, cdtype):
    """GN2 + SiLU + conv2 + bias + identity shortcut (Cin == Cout): plain add."""
    h = h_ref[0].astype(jnp.float32)
    acc = _gn_silu_conv(h, g_ref[...], b_ref[...], r_ref[...], s_ref[...],
                        w_ref, n_per_group, cdtype) + bc_ref[...]
    HW = h.shape[0] * h.shape[1]
    res = res_ref[0].astype(jnp.float32).reshape(HW, res_ref.shape[-1])
    o_ref[...] = (acc + res).reshape(o_ref.shape).astype(o_ref.dtype)


# ------------------------------- wrapper ------------------------------------ #

def _round_up(n, m):
    return (n + m - 1) // m * m


def _pad_to(a, size, axis):
    amt = size - a.shape[axis]
    if amt == 0:
        return a
    pads = [(0, 0)] * a.ndim
    pads[axis] = (0, amt)
    return jnp.pad(a, pads)


def _group_matrices(c_real, c_pad, groups):
    """Reduce (Cp, G) / broadcast (G, Cp) matrices; padded channels get 0 rows."""
    gs = c_real // groups
    ch = jnp.arange(c_pad)
    member = (ch[:, None] // gs == jnp.arange(groups)[None, :]) & (ch[:, None] < c_real)
    r = member.astype(jnp.float32)
    return r, r.T


def resnet_block_forward(x_nchw, emb, params, *, compute_dtype=jnp.bfloat16):
    """Forward pass equivalent to ResnetBlock.forward(x, emb) (eval mode)."""
    B, Cin, H, W = x_nchw.shape
    Cout = params["w1"].shape[-1]
    E = emb.shape[-1]
    HW = H * W
    Cpi, Cpo = _round_up(Cin, LANE), _round_up(Cout, LANE)
    cd = compute_dtype

    x_nhwc = jnp.transpose(x_nchw, (0, 2, 3, 1))                       # NCHW -> NHWC
    xp = _pad_to(x_nhwc, Cpi, 3).astype(jnp.float32)                   # (B, H, W, Cpi)

    # ---------------- padded / re-laid-out parameters -----------------------
    g1 = _pad_to(params["g1"], Cpi, 0).reshape(1, Cpi)
    b1 = _pad_to(params["b1"], Cpi, 0).reshape(1, Cpi)
    r1, s1 = _group_matrices(Cin, Cpi, NUM_GROUPS)
    w1 = _pad_to(_pad_to(params["w1"], Cpi, 2), Cpo, 3).reshape(9, Cpi, Cpo).astype(cd)
    bc1 = _pad_to(params["bc1"], Cpo, 0).reshape(1, Cpo)
    wp = _pad_to(params["wp"], Cpo, 1).astype(cd)
    bp = _pad_to(params["bp"], Cpo, 0).reshape(1, Cpo)

    g2 = _pad_to(params["g2"], Cpo, 0).reshape(1, Cpo)
    b2 = _pad_to(params["b2"], Cpo, 0).reshape(1, Cpo)
    r2, s2 = _group_matrices(Cout, Cpo, NUM_GROUPS)
    w2 = _pad_to(_pad_to(params["w2"], Cpo, 2), Cpo, 3).reshape(9, Cpo, Cpo).astype(cd)
    bc2 = _pad_to(params["bc2"], Cpo, 0).reshape(1, Cpo)

    emb3 = emb.reshape(B, 1, E).astype(jnp.float32)

    cparams = pltpu.CompilerParams(
        dimension_semantics=("parallel",),
        vmem_limit_bytes=48 * 1024 * 1024)

    const2 = lambda b: (0, 0)
    const3 = lambda b: (0, 0, 0)
    perb3 = lambda b: (b, 0, 0)
    perb4 = lambda b: (b, 0, 0, 0)

    # -------- half 1: GN1 + SiLU + conv1 + emb projection (fused) ------------
    kern1 = functools.partial(
        resblock_half1_kernel,
        n_per_group=float(HW * (Cin // NUM_GROUPS)), cdtype=cd)
    h = pl.pallas_call(
        kern1,
        out_shape=jax.ShapeDtypeStruct((B, H, W, Cpo), cd),            # bf16 inter-stage
        grid=(B,),
        in_specs=[
            pl.BlockSpec((1, H, W, Cpi), perb4),
            pl.BlockSpec((1, Cpi), const2),
            pl.BlockSpec((1, Cpi), const2),
            pl.BlockSpec((Cpi, NUM_GROUPS), const2),
            pl.BlockSpec((NUM_GROUPS, Cpi), const2),
            pl.BlockSpec((9, Cpi, Cpo), const3),
            pl.BlockSpec((1, Cpo), const2),
            pl.BlockSpec((1, 1, E), perb3),
            pl.BlockSpec((E, Cpo), const2),
            pl.BlockSpec((1, Cpo), const2),
        ],
        out_specs=pl.BlockSpec((1, H, W, Cpo), perb4),
        compiler_params=cparams,
    )(xp, g1, b1, r1, s1, w1, bc1, emb3, wp, bp)

    # -------- half 2: GN2 + SiLU + [dropout=identity] + conv2 + shortcut ----
    # TODO(synk): Dropout treated as identity (eval-mode semantics); training-mode
    #             random masking not implemented.
    n2 = float(HW * (Cout // NUM_GROUPS))
    if Cin != Cout:
        ws = _pad_to(_pad_to(params["ws"], Cpi, 0), Cpo, 1).astype(cd)
        bs = _pad_to(params["bs"], Cpo, 0).reshape(1, Cpo)
        kern2 = functools.partial(resblock_half2_proj_kernel, n_per_group=n2, cdtype=cd)
        extra_in = (xp, ws, bs)
        extra_specs = [pl.BlockSpec((1, H, W, Cpi), perb4),
                       pl.BlockSpec((Cpi, Cpo), const2),
                       pl.BlockSpec((1, Cpo), const2)]
    else:
        kern2 = functools.partial(resblock_half2_id_kernel, n_per_group=n2, cdtype=cd)
        extra_in = (xp,)
        extra_specs = [pl.BlockSpec((1, H, W, Cpi), perb4)]

    out = pl.pallas_call(
        kern2,
        out_shape=jax.ShapeDtypeStruct((B, H, W, Cpo), jnp.float32),
        grid=(B,),
        in_specs=[
            pl.BlockSpec((1, H, W, Cpo), perb4),
            pl.BlockSpec((1, Cpo), const2),
            pl.BlockSpec((1, Cpo), const2),
            pl.BlockSpec((Cpo, NUM_GROUPS), const2),
            pl.BlockSpec((NUM_GROUPS, Cpo), const2),
            pl.BlockSpec((9, Cpo, Cpo), const3),
            pl.BlockSpec((1, Cpo), const2),
        ] + extra_specs,
        out_specs=pl.BlockSpec((1, H, W, Cpo), perb4),
        compiler_params=cparams,
    )(h, g2, b2, r2, s2, w2, bc2, *extra_in)

    out = out[..., :Cout]                                              # drop lane padding
    return jnp.transpose(out, (0, 3, 1, 2))                            # NHWC -> NCHW


# --------------------------- pure-JAX reference ----------------------------- #

def reference_forward(x_nchw, emb, params):
    hi = jax.lax.Precision.HIGHEST

    def gn(x, g, b, num_groups=NUM_GROUPS):
        B, C, H, W = x.shape
        xg = x.reshape(B, num_groups, C // num_groups, H, W)
        mean = xg.mean(axis=(2, 3, 4), keepdims=True)
        var = ((xg - mean) ** 2).mean(axis=(2, 3, 4), keepdims=True)
        xn = ((xg - mean) / jnp.sqrt(var + EPS)).reshape(B, C, H, W)
        return xn * g[None, :, None, None] + b[None, :, None, None]

    def conv3x3(x, w_hwio, b):
        x_nhwc = jnp.transpose(x, (0, 2, 3, 1))
        y = jax.lax.conv_general_dilated(
            x_nhwc, w_hwio, window_strides=(1, 1), padding="SAME",
            dimension_numbers=("NHWC", "HWIO", "NHWC"), precision=hi)
        return jnp.transpose(y + b[None, None, None, :], (0, 3, 1, 2))

    def silu(v):
        return v * jax.nn.sigmoid(v)

    h = silu(gn(x_nchw, params["g1"], params["b1"]))
    h = conv3x3(h, params["w1"], params["bc1"])
    eproj = jnp.dot(emb, params["wp"], precision=hi) + params["bp"]
    h = h + eproj[:, :, None, None]
    h = silu(gn(h, params["g2"], params["b2"]))
    h = conv3x3(h, params["w2"], params["bc2"])
    if "ws" in params:
        sc = (jnp.einsum("bchw,cd->bdhw", x_nchw, params["ws"], precision=hi)
              + params["bs"][None, :, None, None])
    else:
        sc = x_nchw
    return h + sc


# --------------------------------- main ------------------------------------- #

if __name__ == "__main__":
    B, H, W, E = 2, 8, 8, 16   # GroupNorm(32, C) requires C % 32 == 0

    def make_params(key, cin, cout):
        ks = jax.random.split(key, 12)
        p = {
            "g1": jax.random.normal(ks[0], (cin,), jnp.float32) * 0.1 + 1.0,
            "b1": jax.random.normal(ks[1], (cin,), jnp.float32) * 0.1,
            "w1": jax.random.normal(ks[2], (3, 3, cin, cout), jnp.float32) / (9 * cin) ** 0.5,
            "bc1": jax.random.normal(ks[3], (cout,), jnp.float32) * 0.05,
            "wp": jax.random.normal(ks[4], (E, cout), jnp.float32) / E ** 0.5,
            "bp": jax.random.normal(ks[5], (cout,), jnp.float32) * 0.05,
            "g2": jax.random.normal(ks[6], (cout,), jnp.float32) * 0.1 + 1.0,
            "b2": jax.random.normal(ks[7], (cout,), jnp.float32) * 0.1,
            "w2": jax.random.normal(ks[8], (3, 3, cout, cout), jnp.float32) / (9 * cout) ** 0.5,
            "bc2": jax.random.normal(ks[9], (cout,), jnp.float32) * 0.05,
        }
        if cin != cout:   # shortcut is a 1x1 conv only when channel counts differ
            p["ws"] = jax.random.normal(ks[10], (cin, cout), jnp.float32) / cin ** 0.5
            p["bs"] = jax.random.normal(ks[11], (cout,), jnp.float32) * 0.05
        return p

    configs = [
        # (name, Cin, Cout, [(compute_dtype, tolerance), ...])
        ("proj_shortcut", 32, 64, [(jnp.float32, 2e-3), (jnp.bfloat16, 5e-2)]),
        ("identity_shortcut", 32, 32, [(jnp.bfloat16, 5e-2)]),
    ]

    for name, cin, cout, checks in configs:
        params = make_params(jax.random.PRNGKey(0), cin, cout)
        kx, ke = jax.random.split(jax.random.PRNGKey(1))
        x = jax.random.normal(kx, (B, cin, H, W), jnp.float32)
        emb = jax.random.normal(ke, (B, E), jnp.float32)
        ref = reference_forward(x, emb, params)

        for cdtype, tol in checks:
            out = jax.block_until_ready(
                resnet_block_forward(x, emb, params, compute_dtype=cdtype))
            assert out.shape == (B, cout, H, W)
            if not jnp.allclose(out, ref, atol=tol, rtol=tol):
                raise RuntimeError(
                    f"{name}/{cdtype.__name__}: mismatch vs reference, "
                    f"max_err={float(jnp.max(jnp.abs(out - ref)))}")

    print("KERNEL_OK")
</pallas_src>

<mosaic_0001>
module attributes {stable_mosaic.version = 11 : i64} {
  func.func @resblock_half1_kernel(%arg0: i32, %arg1: memref<1x8x8x128xf32, #tpu.memory_space<vmem>>, %arg2: memref<1x128xf32, #tpu.memory_space<vmem>>, %arg3: memref<1x128xf32, #tpu.memory_space<vmem>>, %arg4: memref<128x32xf32, #tpu.memory_space<vmem>>, %arg5: memref<32x128xf32, #tpu.memory_space<vmem>>, %arg6: memref<9x128x128xf32, #tpu.memory_space<vmem>>, %arg7: memref<1x128xf32, #tpu.memory_space<vmem>>, %arg8: memref<1x1x16xf32, #tpu.memory_space<vmem>>, %arg9: memref<16x128xf32, #tpu.memory_space<vmem>>, %arg10: memref<1x128xf32, #tpu.memory_space<vmem>>, %arg11: memref<1x8x8x128xf32, #tpu.memory_space<vmem>>) attributes {dimension_semantics = [#tpu.dimension_semantics<parallel>], iteration_bounds = array<i64: 2>, scalar_prefetch = 0 : i64, scratch_operands = 0 : i64, tpu.core_type = #tpu.core_type<tc>, window_params = [{transform_indices = @transform_0, window_bounds = array<i64: 1, 8, 8, 128>}, {pipeline_mode = #tpu.pipeline_mode<synchronous>, transform_indices = @transform_1, window_bounds = array<i64: 1, 128>}, {pipeline_mode = #tpu.pipeline_mode<synchronous>, transform_indices = @transform_2, window_bounds = array<i64: 1, 128>}, {pipeline_mode = #tpu.pipeline_mode<synchronous>, transform_indices = @transform_3, window_bounds = array<i64: 128, 32>}, {pipeline_mode = #tpu.pipeline_mode<synchronous>, transform_indices = @transform_4, window_bounds = array<i64: 32, 128>}, {pipeline_mode = #tpu.pipeline_mode<synchronous>, transform_indices = @transform_5, window_bounds = array<i64: 9, 128, 128>}, {pipeline_mode = #tpu.pipeline_mode<synchronous>, transform_indices = @transform_6, window_bounds = array<i64: 1, 128>}, {transform_indices = @transform_7, window_bounds = array<i64: 1, 1, 16>}, {pipeline_mode = #tpu.pipeline_mode<synchronous>, transform_indices = @transform_8, window_bounds = array<i64: 16, 128>}, {pipeline_mode = #tpu.pipeline_mode<synchronous>, transform_indices = @transform_9, window_bounds = array<i64: 1, 128>}, {transform_indices = @transform_10, window_bounds = array<i64: 1, 8, 8, 128>}]} {
    %c0 = arith.constant 0 : index
    %c0_0 = arith.constant 0 : index
    %c0_1 = arith.constant 0 : index
    %c0_2 = arith.constant 0 : index
    %0 = vector.load %arg1[%c0, %c0_0, %c0_1, %c0_2] : memref<1x8x8x128xf32, #tpu.memory_space<vmem>>, vector<1x8x8x128xf32>
    %1 = vector.shape_cast %0 : vector<1x8x8x128xf32> to vector<8x8x128xf32>
    %c0_3 = arith.constant 0 : index
    %c0_4 = arith.constant 0 : index
    %2 = vector.load %arg2[%c0_3, %c0_4] : memref<1x128xf32, #tpu.memory_space<vmem>>, vector<1x128xf32>
    %c0_5 = arith.constant 0 : index
    %c0_6 = arith.constant 0 : index
    %3 = vector.load %arg3[%c0_5, %c0_6] : memref<1x128xf32, #tpu.memory_space<vmem>>, vector<1x128xf32>
    %c0_7 = arith.constant 0 : index
    %c0_8 = arith.constant 0 : index
    %4 = vector.load %arg4[%c0_7, %c0_8] : memref<128x32xf32, #tpu.memory_space<vmem>>, vector<128x32xf32>
    %c0_9 = arith.constant 0 : index
    %c0_10 = arith.constant 0 : index
    %5 = vector.load %arg5[%c0_9, %c0_10] : memref<32x128xf32, #tpu.memory_space<vmem>>, vector<32x128xf32>
    %6 = vector.shape_cast %1 : vector<8x8x128xf32> to vector<64x128xf32>
    %cst = arith.constant dense<0.000000e+00> : vector<128xf32>
    %7 = vector.multi_reduction <add>, %6, %cst [0] : vector<64x128xf32> to vector<128xf32>
    %8 = vector.shape_cast %7 : vector<128xf32> to vector<1x128xf32>
    %cst_11 = arith.constant dense<0.000000e+00> : vector<1x32xf32>
    %9 = tpu.matmul %8, %4, %cst_11 {dimension_numbers = #tpu.dot_dimension_numbers<[1], [0], [0], [1], [0, 0, 1, 1], [], []>} : vector<1x128xf32>, vector<128x32xf32>, vector<1x32xf32> -> vector<1x32xf32>
    %cst_12 = arith.constant 6.400000e+01 : f32
    %10 = vector.broadcast %cst_12 : f32 to vector<1x32xf32>
    %11 = arith.divf %9, %10 : vector<1x32xf32>
    %cst_13 = arith.constant dense<0.000000e+00> : vector<1x128xf32>
    %12 = tpu.matmul %11, %5, %cst_13 {dimension_numbers = #tpu.dot_dimension_numbers<[1], [0], [0], [1], [0, 0, 1, 1], [], []>} : vector<1x32xf32>, vector<32x128xf32>, vector<1x128xf32> -> vector<1x128xf32>
    %13 = vector.broadcast %12 : vector<1x128xf32> to vector<64x128xf32>
    %14 = arith.subf %6, %13 : vector<64x128xf32>
    %15 = arith.mulf %14, %14 : vector<64x128xf32>
    %cst_14 = arith.constant dense<0.000000e+00> : vector<128xf32>
    %16 = vector.multi_reduction <add>, %15, %cst_14 [0] : vector<64x128xf32> to vector<128xf32>
    %17 = vector.shape_cast %16 : vector<128xf32> to vector<1x128xf32>
    %cst_15 = arith.constant dense<0.000000e+00> : vector<1x32xf32>
    %18 = tpu.matmul %17, %4, %cst_15 {dimension_numbers = #tpu.dot_dimension_numbers<[1], [0], [0], [1], [0, 0, 1, 1], [], []>} : vector<1x128xf32>, vector<128x32xf32>, vector<1x32xf32> -> vector<1x32xf32>
    %cst_16 = arith.constant 6.400000e+01 : f32
    %19 = vector.broadcast %cst_16 : f32 to vector<1x32xf32>
    %20 = arith.divf %18, %19 : vector<1x32xf32>
    %cst_17 = arith.constant 9.99999974E-6 : f32
    %21 = vector.broadcast %cst_17 : f32 to vector<1x32xf32>
    %22 = arith.addf %20, %21 : vector<1x32xf32>
    %23 = math.rsqrt %22 : vector<1x32xf32>
    %cst_18 = arith.constant dense<0.000000e+00> : vector<1x128xf32>
    %24 = tpu.matmul %23, %5, %cst_18 {dimension_numbers = #tpu.dot_dimension_numbers<[1], [0], [0], [1], [0, 0, 1, 1], [], []>} : vector<1x32xf32>, vector<32x128xf32>, vector<1x128xf32> -> vector<1x128xf32>
    %25 = vector.broadcast %24 : vector<1x128xf32> to vector<64x128xf32>
    %26 = arith.mulf %14, %25 : vector<64x128xf32>
    %27 = vector.broadcast %2 : vector<1x128xf32> to vector<64x128xf32>
    %28 = arith.mulf %26, %27 : vector<64x128xf32>
    %29 = vector.broadcast %3 : vector<1x128xf32> to vector<64x128xf32>
    %30 = arith.addf %28, %29 : vector<64x128xf32>
    %cst_19 = arith.constant 0.000000e+00 : f32
    %31 = vector.broadcast %cst_19 : f32 to vector<64x128xf32>
    %32 = arith.subf %31, %30 : vector<64x128xf32>
    %33 = math.exp %32 : vector<64x128xf32>
    %cst_20 = arith.constant 1.000000e+00 : f32
    %34 = vector.broadcast %cst_20 : f32 to vector<64x128xf32>
    %35 = arith.addf %34, %33 : vector<64x128xf32>
    %cst_21 = arith.constant 1.000000e+00 : f32
    %36 = vector.broadcast %cst_21 : f32 to vector<64x128xf32>
    %37 = arith.divf %36, %35 : vector<64x128xf32>
    %38 = arith.mulf %30, %37 : vector<64x128xf32>
    %39 = vector.shape_cast %38 : vector<64x128xf32> to vector<8x8x128xf32>
    %cst_22 = arith.constant 0.000000e+00 : f32
    %40 = vector.broadcast %cst_22 : f32 to vector<64x128xf32>
    %cst_23 = arith.constant 0.000000e+00 : f32
    %41 = vector.broadcast %cst_23 : f32 to vector<1x8x128xf32>
    %42 = vector.extract_strided_slice %39 {offsets = [0, 0, 0], sizes = [7, 8, 128], strides = [1, 1, 1]} : vector<8x8x128xf32> to vector<7x8x128xf32>
    %43 = tpu.concatenate %41, %42 in 0 : vector<1x8x128xf32>, vector<7x8x128xf32> -> vector<8x8x128xf32>
    %cst_24 = arith.constant 0.000000e+00 : f32
    %44 = vector.broadcast %cst_24 : f32 to vector<8x1x128xf32>
    %45 = vector.extract_strided_slice %43 {offsets = [0, 0, 0], sizes = [8, 7, 128], strides = [1, 1, 1]} : vector<8x8x128xf32> to vector<8x7x128xf32>
    %46 = tpu.concatenate %44, %45 in 1 : vector<8x1x128xf32>, vector<8x7x128xf32> -> vector<8x8x128xf32>
    %47 = vector.shape_cast %46 : vector<8x8x128xf32> to vector<64x128xf32>
    %c0_25 = arith.constant 0 : index
    %c0_26 = arith.constant 0 : index
    %c0_27 = arith.constant 0 : index
    %48 = vector.load %arg6[%c0_25, %c0_26, %c0_27] : memref<9x128x128xf32, #tpu.memory_space<vmem>>, vector<1x128x128xf32>
    %49 = vector.shape_cast %48 : vector<1x128x128xf32> to vector<128x128xf32>
    %cst_28 = arith.constant dense<0.000000e+00> : vector<64x128xf32>
    %50 = tpu.matmul %47, %49, %cst_28 {dimension_numbers = #tpu.dot_dimension_numbers<[1], [0], [0], [1], [0, 0, 1, 1], [], []>} : vector<64x128xf32>, vector<128x128xf32>, vector<64x128xf32> -> vector<64x128xf32>
    %51 = arith.addf %40, %50 : vector<64x128xf32>
    %cst_29 = arith.constant 0.000000e+00 : f32
    %52 = vector.broadcast %cst_29 : f32 to vector<1x8x128xf32>
    %53 = vector.extract_strided_slice %39 {offsets = [0, 0, 0], sizes = [7, 8, 128], strides = [1, 1, 1]} : vector<8x8x128xf32> to vector<7x8x128xf32>
    %54 = tpu.concatenate %52, %53 in 0 : vector<1x8x128xf32>, vector<7x8x128xf32> -> vector<8x8x128xf32>
    %55 = vector.shape_cast %54 : vector<8x8x128xf32> to vector<64x128xf32>
    %c1 = arith.constant 1 : index
    %c0_30 = arith.constant 0 : index
    %c0_31 = arith.constant 0 : index
    %56 = vector.load %arg6[%c1, %c0_30, %c0_31] : memref<9x128x128xf32, #tpu.memory_space<vmem>>, vector<1x128x128xf32>
    %57 = vector.shape_cast %56 : vector<1x128x128xf32> to vector<128x128xf32>
    %cst_32 = arith.constant dense<0.000000e+00> : vector<64x128xf32>
    %58 = tpu.matmul %55, %57, %cst_32 {dimension_numbers = #tpu.dot_dimension_numbers<[1], [0], [0], [1], [0, 0, 1, 1], [], []>} : vector<64x128xf32>, vector<128x128xf32>, vector<64x128xf32> -> vector<64x128xf32>
    %59 = arith.addf %51, %58 : vector<64x128xf32>
    %cst_33 = arith.constant 0.000000e+00 : f32
    %60 = vector.broadcast %cst_33 : f32 to vector<1x8x128xf32>
    %61 = vector.extract_strided_slice %39 {offsets = [0, 0, 0], sizes = [7, 8, 128], strides = [1, 1, 1]} : vector<8x8x128xf32> to vector<7x8x128xf32>
    %62 = tpu.concatenate %60, %61 in 0 : vector<1x8x128xf32>, vector<7x8x128xf32> -> vector<8x8x128xf32>
    %cst_34 = arith.constant 0.000000e+00 : f32
    %63 = vector.broadcast %cst_34 : f32 to vector<8x1x128xf32>
    %64 = vector.extract_strided_slice %62 {offsets = [0, 1, 0], sizes = [8, 7, 128], strides = [1, 1, 1]} : vector<8x8x128xf32> to vector<8x7x128xf32>
    %65 = tpu.concatenate %64, %63 in 1 : vector<8x7x128xf32>, vector<8x1x128xf32> -> vector<8x8x128xf32>
    %66 = vector.shape_cast %65 : vector<8x8x128xf32> to vector<64x128xf32>
    %c2 = arith.constant 2 : index
    %c0_35 = arith.constant 0 : index
    %c0_36 = arith.constant 0 : index
    %67 = vector.load %arg6[%c2, %c0_35, %c0_36] : memref<9x128x128xf32, #tpu.memory_space<vmem>>, vector<1x128x128xf32>
    %68 = vector.shape_cast %67 : vector<1x128x128xf32> to vector<128x128xf32>
    %cst_37 = arith.constant dense<0.000000e+00> : vector<64x128xf32>
    %69 = tpu.matmul %66, %68, %cst_37 {dimension_numbers = #tpu.dot_dimension_numbers<[1], [0], [0], [1], [0, 0, 1, 1], [], []>} : vector<64x128xf32>, vector<128x128xf32>, vector<64x128xf32> -> vector<64x128xf32>
    %70 = arith.addf %59, %69 : vector<64x128xf32>
    %cst_38 = arith.constant 0.000000e+00 : f32
    %71 = vector.broadcast %cst_38 : f32 to vector<8x1x128xf32>
    %72 = vector.extract_strided_slice %39 {offsets = [0, 0, 0], sizes = [8, 7, 128], strides = [1, 1, 1]} : vector<8x8x128xf32> to vector<8x7x128xf32>
    %73 = tpu.concatenate %71, %72 in 1 : vector<8x1x128xf32>, vector<8x7x128xf32> -> vector<8x8x128xf32>
    %74 = vector.shape_cast %73 : vector<8x8x128xf32> to vector<64x128xf32>
    %c3 = arith.constant 3 : index
    %c0_39 = arith.constant 0 : index
    %c0_40 = arith.constant 0 : index
    %75 = vector.load %arg6[%c3, %c0_39, %c0_40] : memref<9x128x128xf32, #tpu.memory_space<vmem>>, vector<1x128x128xf32>
    %76 = vector.shape_cast %75 : vector<1x128x128xf32> to vector<128x128xf32>
    %cst_41 = arith.constant dense<0.000000e+00> : vector<64x128xf32>
    %77 = tpu.matmul %74, %76, %cst_41 {dimension_numbers = #tpu.dot_dimension_numbers<[1], [0], [0], [1], [0, 0, 1, 1], [], []>} : vector<64x128xf32>, vector<128x128xf32>, vector<64x128xf32> -> vector<64x128xf32>
    %78 = arith.addf %70, %77 : vector<64x128xf32>
    %79 = vector.shape_cast %39 : vector<8x8x128xf32> to vector<64x128xf32>
    %c4 = arith.constant 4 : index
    %c0_42 = arith.constant 0 : index
    %c0_43 = arith.constant 0 : index
    %80 = vector.load %arg6[%c4, %c0_42, %c0_43] : memref<9x128x128xf32, #tpu.memory_space<vmem>>, vector<1x128x128xf32>
    %81 = vector.shape_cast %80 : vector<1x128x128xf32> to vector<128x128xf32>
    %cst_44 = arith.constant dense<0.000000e+00> : vector<64x128xf32>
    %82 = tpu.matmul %79, %81, %cst_44 {dimension_numbers = #tpu.dot_dimension_numbers<[1], [0], [0], [1], [0, 0, 1, 1], [], []>} : vector<64x128xf32>, vector<128x128xf32>, vector<64x128xf32> -> vector<64x128xf32>
    %83 = arith.addf %78, %82 : vector<64x128xf32>
    %cst_45 = arith.constant 0.000000e+00 : f32
    %84 = vector.broadcast %cst_45 : f32 to vector<8x1x128xf32>
    %85 = vector.extract_strided_slice %39 {offsets = [0, 1, 0], sizes = [8, 7, 128], strides = [1, 1, 1]} : vector<8x8x128xf32> to vector<8x7x128xf32>
    %86 = tpu.concatenate %85, %84 in 1 : vector<8x7x128xf32>, vector<8x1x128xf32> -> vector<8x8x128xf32>
    %87 = vector.shape_cast %86 : vector<8x8x128xf32> to vector<64x128xf32>
    %c5 = arith.constant 5 : index
    %c0_46 = arith.constant 0 : index
    %c0_47 = arith.constant 0 : index
    %88 = vector.load %arg6[%c5, %c0_46, %c0_47] : memref<9x128x128xf32, #tpu.memory_space<vmem>>, vector<1x128x128xf32>
    %89 = vector.shape_cast %88 : vector<1x128x128xf32> to vector<128x128xf32>
    %cst_48 = arith.constant dense<0.000000e+00> : vector<64x128xf32>
    %90 = tpu.matmul %87, %89, %cst_48 {dimension_numbers = #tpu.dot_dimension_numbers<[1], [0], [0], [1], [0, 0, 1, 1], [], []>} : vector<64x128xf32>, vector<128x128xf32>, vector<64x128xf32> -> vector<64x128xf32>
    %91 = arith.addf %83, %90 : vector<64x128xf32>
    %cst_49 = arith.constant 0.000000e+00 : f32
    %92 = vector.broadcast %cst_49 : f32 to vector<1x8x128xf32>
    %93 = vector.extract_strided_slice %39 {offsets = [1, 0, 0], sizes = [7, 8, 128], strides = [1, 1, 1]} : vector<8x8x128xf32> to vector<7x8x128xf32>
    %94 = tpu.concatenate %93, %92 in 0 : vector<7x8x128xf32>, vector<1x8x128xf32> -> vector<8x8x128xf32>
    %cst_50 = arith.constant 0.000000e+00 : f32
    %95 = vector.broadcast %cst_50 : f32 to vector<8x1x128xf32>
    %96 = vector.extract_strided_slice %94 {offsets = [0, 0, 0], sizes = [8, 7, 128], strides = [1, 1, 1]} : vector<8x8x128xf32> to vector<8x7x128xf32>
    %97 = tpu.concatenate %95, %96 in 1 : vector<8x1x128xf32>, vector<8x7x128xf32> -> vector<8x8x128xf32>
    %98 = vector.shape_cast %97 : vector<8x8x128xf32> to vector<64x128xf32>
    %c6 = arith.constant 6 : index
    %c0_51 = arith.constant 0 : index
    %c0_52 = arith.constant 0 : index
    %99 = vector.load %arg6[%c6, %c0_51, %c0_52] : memref<9x128x128xf32, #tpu.memory_space<vmem>>, vector<1x128x128xf32>
    %100 = vector.shape_cast %99 : vector<1x128x128xf32> to vector<128x128xf32>
    %cst_53 = arith.constant dense<0.000000e+00> : vector<64x128xf32>
    %101 = tpu.matmul %98, %100, %cst_53 {dimension_numbers = #tpu.dot_dimension_numbers<[1], [0], [0], [1], [0, 0, 1, 1], [], []>} : vector<64x128xf32>, vector<128x128xf32>, vector<64x128xf32> -> vector<64x128xf32>
    %102 = arith.addf %91, %101 : vector<64x128xf32>
    %cst_54 = arith.constant 0.000000e+00 : f32
    %103 = vector.broadcast %cst_54 : f32 to vector<1x8x128xf32>
    %104 = vector.extract_strided_slice %39 {offsets = [1, 0, 0], sizes = [7, 8, 128], strides = [1, 1, 1]} : vector<8x8x128xf32> to vector<7x8x128xf32>
    %105 = tpu.concatenate %104, %103 in 0 : vector<7x8x128xf32>, vector<1x8x128xf32> -> vector<8x8x128xf32>
    %106 = vector.shape_cast %105 : vector<8x8x128xf32> to vector<64x128xf32>
    %c7 = arith.constant 7 : index
    %c0_55 = arith.constant 0 : index
    %c0_56 = arith.constant 0 : index
    %107 = vector.load %arg6[%c7, %c0_55, %c0_56] : memref<9x128x128xf32, #tpu.memory_space<vmem>>, vector<1x128x128xf32>
    %108 = vector.shape_cast %107 : vector<1x128x128xf32> to vector<128x128xf32>
    %cst_57 = arith.constant dense<0.000000e+00> : vector<64x128xf32>
    %109 = tpu.matmul %106, %108, %cst_57 {dimension_numbers = #tpu.dot_dimension_numbers<[1], [0], [0], [1], [0, 0, 1, 1], [], []>} : vector<64x128xf32>, vector<128x128xf32>, vector<64x128xf32> -> vector<64x128xf32>
    %110 = arith.addf %102, %109 : vector<64x128xf32>
    %cst_58 = arith.constant 0.000000e+00 : f32
    %111 = vector.broadcast %cst_58 : f32 to vector<1x8x128xf32>
    %112 = vector.extract_strided_slice %39 {offsets = [1, 0, 0], sizes = [7, 8, 128], strides = [1, 1, 1]} : vector<8x8x128xf32> to vector<7x8x128xf32>
    %113 = tpu.concatenate %112, %111 in 0 : vector<7x8x128xf32>, vector<1x8x128xf32> -> vector<8x8x128xf32>
    %cst_59 = arith.constant 0.000000e+00 : f32
    %114 = vector.broadcast %cst_59 : f32 to vector<8x1x128xf32>
    %115 = vector.extract_strided_slice %113 {offsets = [0, 1, 0], sizes = [8, 7, 128], strides = [1, 1, 1]} : vector<8x8x128xf32> to vector<8x7x128xf32>
    %116 = tpu.concatenate %115, %114 in 1 : vector<8x7x128xf32>, vector<8x1x128xf32> -> vector<8x8x128xf32>
    %117 = vector.shape_cast %116 : vector<8x8x128xf32> to vector<64x128xf32>
    %c8 = arith.constant 8 : index
    %c0_60 = arith.constant 0 : index
    %c0_61 = arith.constant 0 : index
    %118 = vector.load %arg6[%c8, %c0_60, %c0_61] : memref<9x128x128xf32, #tpu.memory_space<vmem>>, vector<1x128x128xf32>
    %119 = vector.shape_cast %118 : vector<1x128x128xf32> to vector<128x128xf32>
    %cst_62 = arith.constant dense<0.000000e+00> : vector<64x128xf32>
    %120 = tpu.matmul %117, %119, %cst_62 {dimension_numbers = #tpu.dot_dimension_numbers<[1], [0], [0], [1], [0, 0, 1, 1], [], []>} : vector<64x128xf32>, vector<128x128xf32>, vector<64x128xf32> -> vector<64x128xf32>
    %121 = arith.addf %110, %120 : vector<64x128xf32>
    %c0_63 = arith.constant 0 : index
    %c0_64 = arith.constant 0 : index
    %122 = vector.load %arg7[%c0_63, %c0_64] : memref<1x128xf32, #tpu.memory_space<vmem>>, vector<1x128xf32>
    %123 = vector.broadcast %122 : vector<1x128xf32> to vector<64x128xf32>
    %124 = arith.addf %121, %123 : vector<64x128xf32>
    %c0_65 = arith.constant 0 : index
    %c0_66 = arith.constant 0 : index
    %c0_67 = arith.constant 0 : index
    %125 = vector.load %arg8[%c0_65, %c0_66, %c0_67] : memref<1x1x16xf32, #tpu.memory_space<vmem>>, vector<1x1x16xf32>
    %126 = vector.shape_cast %125 : vector<1x1x16xf32> to vector<1x16xf32>
    %c0_68 = arith.constant 0 : index
    %c0_69 = arith.constant 0 : index
    %127 = vector.load %arg9[%c0_68, %c0_69] : memref<16x128xf32, #tpu.memory_space<vmem>>, vector<16x128xf32>
    %cst_70 = arith.constant dense<0.000000e+00> : vector<1x128xf32>
    %128 = tpu.matmul %126, %127, %cst_70 {dimension_numbers = #tpu.dot_dimension_numbers<[1], [0], [0], [1], [0, 0, 1, 1], [], []>} : vector<1x16xf32>, vector<16x128xf32>, vector<1x128xf32> -> vector<1x128xf32>
    %c0_71 = arith.constant 0 : index
    %c0_72 = arith.constant 0 : index
    %129 = vector.load %arg10[%c0_71, %c0_72] : memref<1x128xf32, #tpu.memory_space<vmem>>, vector<1x128xf32>
    %130 = arith.addf %128, %129 : vector<1x128xf32>
    %131 = vector.broadcast %130 : vector<1x128xf32> to vector<64x128xf32>
    %132 = arith.addf %124, %131 : vector<64x128xf32>
    %133 = vector.shape_cast %132 : vector<64x128xf32> to vector<1x8x8x128xf32>
    %c0_73 = arith.constant 0 : index
    %c0_74 = arith.constant 0 : index
    %c0_75 = arith.constant 0 : index
    %c0_76 = arith.constant 0 : index
    %134 = vector.load %arg11[%c0_73, %c0_74, %c0_75, %c0_76] : memref<1x8x8x128xf32, #tpu.memory_space<vmem>>, vector<1x8x8x128xf32>
    tpu.vector_store %arg11[%c0_73, %c0_74, %c0_75, %c0_76], %133 {strides = array<i32>} : memref<1x8x8x128xf32, #tpu.memory_space<vmem>>, vector<1x8x8x128xf32>,
    return
  }
  func.func @transform_0(%arg0: i32) -> (i32, i32, i32, i32) {
    %c0_i32 = arith.constant 0 : i32
    %c0_i32_0 = arith.constant 0 : i32
    %c0_i32_1 = arith.constant 0 : i32
    %c0_i32_2 = arith.constant 0 : i32
    return %arg0, %c0_i32, %c0_i32_0, %c0_i32_1 : i32, i32, i32, i32
  }
  func.func @transform_1(%arg0: i32) -> (i32, i32) {
    %c0_i32 = arith.constant 0 : i32
    %c0_i32_0 = arith.constant 0 : i32
    %c0_i32_1 = arith.constant 0 : i32
    return %c0_i32, %c0_i32_0 : i32, i32
  }
  func.func @transform_2(%arg0: i32) -> (i32, i32) {
    %c0_i32 = arith.constant 0 : i32
    %c0_i32_0 = arith.constant 0 : i32
    %c0_i32_1 = arith.constant 0 : i32
    return %c0_i32, %c0_i32_0 : i32, i32
  }
  func.func @transform_3(%arg0: i32) -> (i32, i32) {
    %c0_i32 = arith.constant 0 : i32
    %c0_i32_0 = arith.constant 0 : i32
    %c0_i32_1 = arith.constant 0 : i32
    return %c0_i32, %c0_i32_0 : i32, i32
  }
  func.func @transform_4(%arg0: i32) -> (i32, i32) {
    %c0_i32 = arith.constant 0 : i32
    %c0_i32_0 = arith.constant 0 : i32
    %c0_i32_1 = arith.constant 0 : i32
    return %c0_i32, %c0_i32_0 : i32, i32
  }
  func.func @transform_5(%arg0: i32) -> (i32, i32, i32) {
    %c0_i32 = arith.constant 0 : i32
    %c0_i32_0 = arith.constant 0 : i32
    %c0_i32_1 = arith.constant 0 : i32
    %c0_i32_2 = arith.constant 0 : i32
    return %c0_i32, %c0_i32_0, %c0_i32_1 : i32, i32, i32
  }
  func.func @transform_6(%arg0: i32) -> (i32, i32) {
    %c0_i32 = arith.constant 0 : i32
    %c0_i32_0 = arith.constant 0 : i32
    %c0_i32_1 = arith.constant 0 : i32
    return %c0_i32, %c0_i32_0 : i32, i32
  }
  func.func @transform_7(%arg0: i32) -> (i32, i32, i32) {
    %c0_i32 = arith.constant 0 : i32
    %c0_i32_0 = arith.constant 0 : i32
    %c0_i32_1 = arith.constant 0 : i32
    return %arg0, %c0_i32, %c0_i32_0 : i32, i32, i32
  }
  func.func @transform_8(%arg0: i32) -> (i32, i32) {
    %c0_i32 = arith.constant 0 : i32
    %c0_i32_0 = arith.constant 0 : i32
    %c0_i32_1 = arith.constant 0 : i32
    return %c0_i32, %c0_i32_0 : i32, i32
  }
  func.func @transform_9(%arg0: i32) -> (i32, i32) {
    %c0_i32 = arith.constant 0 : i32
    %c0_i32_0 = arith.constant 0 : i32
    %c0_i32_1 = arith.constant 0 : i32
    return %c0_i32, %c0_i32_0 : i32, i32
  }
  func.func @transform_10(%arg0: i32) -> (i32, i32, i32, i32) {
    %c0_i32 = arith.constant 0 : i32
    %c0_i32_0 = arith.constant 0 : i32
    %c0_i32_1 = arith.constant 0 : i32
    %c0_i32_2 = arith.constant 0 : i32
    return %arg0, %c0_i32, %c0_i32_0, %c0_i32_1 : i32, i32, i32, i32
  }
}

</mosaic_0001>

<llo_original>
// kernel: tpu_custom_call.1
$region0: #{tpu_custom_call.1}
  #allocation0 [shape = 'u32[]', space=smem, size = 0x4, offset = 0x4, fixed_abs, tag = 'smem constant byte address 0x4 - core index']
  #allocation1 [shape = 'u32[144,128]{1,0:T(1,128)}', space=vmem, size = 0x12000, scoped, tag = 'internal scratch']
  %s0 = inlined_call_operand.vmem [shape: f32[2,8,8,128], index: 0, kind: input, shape index: {}]
  %s1 = inlined_call_operand.vmem [shape: f32[1,128], index: 1, kind: input, shape index: {}]
  %s2 = inlined_call_operand.hbm [shape: f32[1,128], index: 2, kind: input, shape index: {}]
  %s3 = inlined_call_operand.vmem [shape: f32[128,32], index: 3, kind: input, shape index: {}]
  %s4 = inlined_call_operand.vmem [shape: f32[32,128], index: 4, kind: input, shape index: {}]
  %s5 = inlined_call_operand.hbm [shape: f32[9,128,128], index: 5, kind: input, shape index: {}]
  %s6 = inlined_call_operand.vmem [shape: f32[1,128], index: 6, kind: input, shape index: {}]
  %s7 = inlined_call_operand.vmem [shape: f32[2,1,16], index: 7, kind: input, shape index: {}]
  %s8 = inlined_call_operand.hbm [shape: f32[16,128], index: 8, kind: input, shape index: {}]
  %s9 = inlined_call_operand.vmem [shape: f32[1,128], index: 9, kind: input, shape index: {}]
  %s10 = inlined_call_operand.hbm [shape: f32[2,8,8,128], index: 10, kind: output, shape index: {}]
  %s11 = sld [smem:[#allocation0]]
  $region85: #{tpu_custom_call.1} parent=0
    _
  %s13 = ssub.s32 1, %s11
  %s14 = scalar_select 0, %s13, %s11
  $region1: #{tpu_custom_call.1} parent=0
    #allocation2 [shape = 'u8[512]{0}', space=vmem, size = 0x400, scoped, tag = 'input window, operand 2, single buffered']
    #allocation3 [shape = 's32[2]{0}', space=sflag, size = 0x8, scoped, tag = 'scoped memory for tpu_custom_call.1']
    #allocation4 [shape = 's32[2]{0}', space=sflag, size = 0x8, scoped, tag = 'scoped memory for tpu_custom_call.1']
    #allocation5 [shape = 'u8[589824]{0}', space=vmem, size = 0x90000, scoped, tag = 'input window, operand 5, single buffered']
    #allocation6 [shape = 's32[1]{0}', space=sflag, size = 0x4, scoped, tag = 'scoped memory for tpu_custom_call.1']
    #allocation7 [shape = 'u8[8192]{0}', space=vmem, size = 0x2000, scoped, tag = 'input window, operand 8, single buffered']
    #allocation8 [shape = 'u8[65536]{0}', space=vmem, size = 0x10000, scoped, tag = 'output window, operand 0']
    %15 = vsyncpa [#allocation3], 0
    %16 = vsyncpa [#allocation6], 0
    %17 = vsyncpa [#allocation4], 0
    %s18 = scalar_lea.sflag [#allocation4], 1
    %19 = vsyncpa %s18, 0
    loop: start=0, step=1, limit=4
    $region2: #{tpu_custom_call.1} parent=1 // loop_pre_header
      _
    $region3: #{tpu_custom_call.1} parent=1 // loop_header
      %s21 = sphi 0, %s25
      %p22 = scmp.ge.s32.totalorder %s21, 4
      %s31 = sphi 0, %s33
      %s34 = sphi 0, %s31
      %s35 = sphi 0, %s34
      %s51 = sphi 0, %s35
      %s55 = sphi 0, %s55
      %s57 = sphi 0, %s55
      %s58 = sphi 0, %s57
      %s72 = sphi 0, %s58
      %s76 = sphi 0, %s76
      %s78 = sphi 0, %s76
      %s79 = sphi 0, %s78
      %s93 = sphi 0, %s79
      %s97 = sphi 0, %s97
      %s99 = sphi 0, %s97
      %s100 = sphi 0, %s99
      %s114 = sphi 0, %s100
      %s118 = sphi 0, %s118
      %s120 = sphi 0, %s118
      %s121 = sphi 0, %s120
      %s135 = sphi 0, %s121
      %s139 = sphi 0, %s139
      %s141 = sphi 0, %s139
      %s142 = sphi 0, %s141
      %s156 = sphi 0, %s142
      %s160 = sphi 0, %s160
      %s162 = sphi 0, %s160
      %s163 = sphi 0, %s162
      %s177 = sphi 0, %s163
      %s183 = sphi 0, %s185
      %s186 = sphi 0, %s183
      %s187 = sphi 0, %s186
      %s203 = sphi 0, %s187
      %s207 = sphi 0, %s207
      %s209 = sphi 0, %s207
      %s210 = sphi 0, %s209
      %s224 = sphi 0, %s210
      %s228 = sphi 0, %s228
      %s230 = sphi 0, %s228
      %s231 = sphi 0, %s230
      %s245 = sphi 0, %s231
      %s251 = sphi 0, %s253
      %s254 = sphi 0, %s251
      %s255 = sphi 0, %s254
      %s271 = sphi 0, %s255
    $region4: #{tpu_custom_call.1} parent=1 // loop_header_branch
      %24 = sbr.rel (%p22) target = $region8
    $region5: #{tpu_custom_call.1} parent=1 // loop_body
      %s26 = ssub.s32 %s21, 1
      %s27 = ssub.s32 %s21, 2
      %s28 = sadd.s32 %s21, 1
      %s29 = ssub.s32 %s21, %s28
      %p30 = scmp.eq.s32.totalorder %s29, 0
      %s32 = sadd.s32 %s31, 1
      %s33 = scalar_select %p30, %s31, %s32
      %p36 = pneg %p30
      %p37 = scmp.eq.s32.totalorder %s21, 1
      %p38 = por %p36, %p37
      %p39 = scmp.ne.s32.totalorder %s31, %s34
      %p40 = scmp.eq.s32.totalorder %s21, 0
      %p41 = por %p39, %p40
      %p42 = scmp.ne.s32.totalorder %s31, %s34
      %p43 = scmp.eq.s32.totalorder %s26, 1
      %p44 = por %p42, %p43
      %p45 = scmp.ne.s32.totalorder %s34, %s35
      %p46 = scmp.eq.s32.totalorder %s26, 0
      %p47 = por %p45, %p46
      %p48 = scmp.ne.s32.totalorder %s34, %s35
      %p49 = scmp.eq.s32.totalorder %s27, 1
      %p50 = por %p48, %p49
      %p52 = scmp.ne.s32.totalorder %s35, %s51
      %p53 = scmp.eq.s32.totalorder %s27, 0
      %p54 = por %p52, %p53
      %s56 = sadd.s32 %s55, 1
      %p59 = scmp.eq.s32.totalorder %s21, 1
      %p60 = scmp.ne.s32.totalorder %s55, %s57
      %p61 = scmp.eq.s32.totalorder %s21, 0
      %p62 = por %p60, %p61
      %p63 = scmp.ne.s32.totalorder %s55, %s57
      %p64 = scmp.eq.s32.totalorder %s26, 1
      %p65 = por %p63, %p64
      %p66 = scmp.ne.s32.totalorder %s57, %s58
      %p67 = scmp.eq.s32.totalorder %s26, 0
      %p68 = por %p66, %p67
      %p69 = scmp.ne.s32.totalorder %s57, %s58
      %p70 = scmp.eq.s32.totalorder %s27, 1
      %p71 = por %p69, %p70
      %p73 = scmp.ne.s32.totalorder %s58, %s72
      %p74 = scmp.eq.s32.totalorder %s27, 0
      %p75 = por %p73, %p74
      %s77 = sadd.s32 %s76, 1
      %p80 = scmp.eq.s32.totalorder %s21, 1
      %p81 = scmp.ne.s32.totalorder %s76, %s78
      %p82 = scmp.eq.s32.totalorder %s21, 0
      %p83 = por %p81, %p82
      %p84 = scmp.ne.s32.totalorder %s76, %s78
      %p85 = scmp.eq.s32.totalorder %s26, 1
      %p86 = por %p84, %p85
      %p87 = scmp.ne.s32.totalorder %s78, %s79
      %p88 = scmp.eq.s32.totalorder %s26, 0
      %p89 = por %p87, %p88
      %p90 = scmp.ne.s32.totalorder %s78, %s79
      %p91 = scmp.eq.s32.totalorder %s27, 1
      %p92 = por %p90, %p91
      %p94 = scmp.ne.s32.totalorder %s79, %s93
      %p95 = scmp.eq.s32.totalorder %s27, 0
      %p96 = por %p94, %p95
      %s98 = sadd.s32 %s97, 1
      %p101 = scmp.eq.s32.totalorder %s21, 1
      %p102 = scmp.ne.s32.totalorder %s97, %s99
      %p103 = scmp.eq.s32.totalorder %s21, 0
      %p104 = por %p102, %p103
      %p105 = scmp.ne.s32.totalorder %s97, %s99
      %p106 = scmp.eq.s32.totalorder %s26, 1
      %p107 = por %p105, %p106
      %p108 = scmp.ne.s32.totalorder %s99, %s100
      %p109 = scmp.eq.s32.totalorder %s26, 0
      %p110 = por %p108, %p109
      %p111 = scmp.ne.s32.totalorder %s99, %s100
      %p112 = scmp.eq.s32.totalorder %s27, 1
      %p113 = por %p111, %p112
      %p115 = scmp.ne.s32.totalorder %s100, %s114
      %p116 = scmp.eq.s32.totalorder %s27, 0
      %p117 = por %p115, %p116
      %s119 = sadd.s32 %s118, 1
      %p122 = scmp.eq.s32.totalorder %s21, 1
      %p123 = scmp.ne.s32.totalorder %s118, %s120
      %p124 = scmp.eq.s32.totalorder %s21, 0
      %p125 = por %p123, %p124
      %p126 = scmp.ne.s32.totalorder %s118, %s120
      %p127 = scmp.eq.s32.totalorder %s26, 1
      %p128 = por %p126, %p127
      %p129 = scmp.ne.s32.totalorder %s120, %s121
      %p130 = scmp.eq.s32.totalorder %s26, 0
      %p131 = por %p129, %p130
      %p132 = scmp.ne.s32.totalorder %s120, %s121
      %p133 = scmp.eq.s32.totalorder %s27, 1
      %p134 = por %p132, %p133
      %p136 = scmp.ne.s32.totalorder %s121, %s135
      %p137 = scmp.eq.s32.totalorder %s27, 0
      %p138 = por %p136, %p137
      %s140 = sadd.s32 %s139, 1
      %p143 = scmp.eq.s32.totalorder %s21, 1
      %p144 = scmp.ne.s32.totalorder %s139, %s141
      %p145 = scmp.eq.s32.totalorder %s21, 0
      %p146 = por %p144, %p145
      %p147 = scmp.ne.s32.totalorder %s139, %s141
      %p148 = scmp.eq.s32.totalorder %s26, 1
      %p149 = por %p147, %p148
      %p150 = scmp.ne.s32.totalorder %s141, %s142
      %p151 = scmp.eq.s32.totalorder %s26, 0
      %p152 = por %p150, %p151
      %p153 = scmp.ne.s32.totalorder %s141, %s142
      %p154 = scmp.eq.s32.totalorder %s27, 1
      %p155 = por %p153, %p154
      %p157 = scmp.ne.s32.totalorder %s142, %s156
      %p158 = scmp.eq.s32.totalorder %s27, 0
      %p159 = por %p157, %p158
      %s161 = sadd.s32 %s160, 1
      %p164 = scmp.eq.s32.totalorder %s21, 1
      %p165 = scmp.ne.s32.totalorder %s160, %s162
      %p166 = scmp.eq.s32.totalorder %s21, 0
      %p167 = por %p165, %p166
      %p168 = scmp.ne.s32.totalorder %s160, %s162
      %p169 = scmp.eq.s32.totalorder %s26, 1
      %p170 = por %p168, %p169
      %p171 = scmp.ne.s32.totalorder %s162, %s163
      %p172 = scmp.eq.s32.totalorder %s26, 0
      %p173 = por %p171, %p172
      %p174 = scmp.ne.s32.totalorder %s162, %s163
      %p175 = scmp.eq.s32.totalorder %s27, 1
      %p176 = por %p174, %p175
      %p178 = scmp.ne.s32.totalorder %s163, %s177
      %p179 = scmp.eq.s32.totalorder %s27, 0
      %p180 = por %p178, %p179
      %s181 = ssub.s32 %s21, %s28
      %p182 = scmp.eq.s32.totalorder %s181, 0
      %s184 = sadd.s32 %s183, 1
      %s185 = scalar_select %p182, %s183, %s184
      %p188 = pneg %p182
      %p189 = scmp.eq.s32.totalorder %s21, 1
      %p190 = por %p188, %p189
      %p191 = scmp.ne.s32.totalorder %s183, %s186
      %p192 = scmp.eq.s32.totalorder %s21, 0
      %p193 = por %p191, %p192
      %p194 = scmp.ne.s32.totalorder %s183, %s186
      %p195 = scmp.eq.s32.totalorder %s26, 1
      %p196 = por %p194, %p195
      %p197 = scmp.ne.s32.totalorder %s186, %s187
      %p198 = scmp.eq.s32.totalorder %s26, 0
      %p199 = por %p197, %p198
      %p200 = scmp.ne.s32.totalorder %s186, %s187
      %p201 = scmp.eq.s32.totalorder %s27, 1
      %p202 = por %p200, %p201
      %p204 = scmp.ne.s32.totalorder %s187, %s203
      %p205 = scmp.eq.s32.totalorder %s27, 0
      %p206 = por %p204, %p205
      %s208 = sadd.s32 %s207, 1
      %p211 = scmp.eq.s32.totalorder %s21, 1
      %p212 = scmp.ne.s32.totalorder %s207, %s209
      %p213 = scmp.eq.s32.totalorder %s21, 0
      %p214 = por %p212, %p213
      %p215 = scmp.ne.s32.totalorder %s207, %s209
      %p216 = scmp.eq.s32.totalorder %s26, 1
      %p217 = por %p215, %p216
      %p218 = scmp.ne.s32.totalorder %s209, %s210
      %p219 = scmp.eq.s32.totalorder %s26, 0
      %p220 = por %p218, %p219
      %p221 = scmp.ne.s32.totalorder %s209, %s210
      %p222 = scmp.eq.s32.totalorder %s27, 1
      %p223 = por %p221, %p222
      %p225 = scmp.ne.s32.totalorder %s210, %s224
      %p226 = scmp.eq.s32.totalorder %s27, 0
      %p227 = por %p225, %p226
      %s229 = sadd.s32 %s228, 1
      %p232 = scmp.eq.s32.totalorder %s21, 1
      %p233 = scmp.ne.s32.totalorder %s228, %s230
      %p234 = scmp.eq.s32.totalorder %s21, 0
      %p235 = por %p233, %p234
      %p236 = scmp.ne.s32.totalorder %s228, %s230
      %p237 = scmp.eq.s32.totalorder %s26, 1
      %p238 = por %p236, %p237
      %p239 = scmp.ne.s32.totalorder %s230, %s231
      %p240 = scmp.eq.s32.totalorder %s26, 0
      %p241 = por %p239, %p240
      %p242 = scmp.ne.s32.totalorder %s230, %s231
      %p243 = scmp.eq.s32.totalorder %s27, 1
      %p244 = por %p242, %p243
      %p246 = scmp.ne.s32.totalorder %s231, %s245
      %p247 = scmp.eq.s32.totalorder %s27, 0
      %p248 = por %p246, %p247
      %s249 = ssub.s32 %s21, %s28
      %p250 = scmp.eq.s32.totalorder %s249, 0
      %s252 = sadd.s32 %s251, 1
      %s253 = scalar_select %p250, %s251, %s252
      %p256 = pneg %p250
      %p257 = scmp.eq.s32.totalorder %s21, 1
      %p258 = por %p256, %p257
      %p259 = scmp.ne.s32.totalorder %s251, %s254
      %p260 = scmp.eq.s32.totalorder %s21, 0
      %p261 = por %p259, %p260
      %p262 = scmp.ne.s32.totalorder %s251, %s254
      %p263 = scmp.eq.s32.totalorder %s26, 1
      %p264 = por %p262, %p263
      %p265 = scmp.ne.s32.totalorder %s254, %s255
      %p266 = scmp.eq.s32.totalorder %s26, 0
      %p267 = por %p265, %p266
      %p268 = scmp.ne.s32.totalorder %s254, %s255
      %p269 = scmp.eq.s32.totalorder %s27, 1
      %p270 = por %p268, %p269
      %p272 = scmp.ne.s32.totalorder %s255, %s271
      %p273 = scmp.eq.s32.totalorder %s27, 0
      %p274 = por %p272, %p273
      %p275 = scmp.le.s32.totalorder 1, %s21
      %p276 = scmp.lt.s32.totalorder %s21, 3
      %p277 = pnand %p275, %p276
      %p278 = pneg %p277
      // Predicated region
      $region9: #{tpu_custom_call.1} parent=5 // pred_check
        _
      $region10: #{tpu_custom_call.1} parent=5 // pred_check_branch
        %280 = sbr.rel (%p277) target = $region12
      $region11: #{tpu_custom_call.1} parent=5 // pred_region
        %s281 = ssub.s32 %s21, 1
        // Predicated region
        $region13: #{tpu_custom_call.1} parent=11 // pred_check
          %p282 = pneg %p68
        $region14: #{tpu_custom_call.1} parent=11 // pred_check_branch
          %284 = sbr.rel (%p282) target = $region16
        $region15: #{tpu_custom_call.1} parent=11 // pred_region
          _
        $region16: #{tpu_custom_call.1} parent=11 // pred_fallthru
          _
        // Predicated region
        $region17: #{tpu_custom_call.1} parent=11 // pred_check
          %p285 = pneg %p89
        $region18: #{tpu_custom_call.1} parent=11 // pred_check_branch
          %287 = sbr.rel (%p285) target = $region20
        $region19: #{tpu_custom_call.1} parent=11 // pred_region
          %s289 = ssub.s32 16, 16
          %290 = vsyncadd [#allocation3], %s289
          %s292 = sshll.u32 [#allocation2], 4
          %s293 = int_to_ptr.vmem [resolvable:$true] %s292
          %295 = dma.hbm_to_vmem [thread:$0]  %s2, 16, %s293, [#allocation3]
        $region20: #{tpu_custom_call.1} parent=11 // pred_fallthru
          _
        // Predicated region
        $region21: #{tpu_custom_call.1} parent=11 // pred_check
          %p296 = pneg %p110
        $region22: #{tpu_custom_call.1} parent=11 // pred_check_branch
          %298 = sbr.rel (%p296) target = $region24
        $region23: #{tpu_custom_call.1} parent=11 // pred_region
          _
        $region24: #{tpu_custom_call.1} parent=11 // pred_fallthru
          _
        // Predicated region
        $region25: #{tpu_custom_call.1} parent=11 // pred_check
          %p299 = pneg %p131
        $region26: #{tpu_custom_call.1} parent=11 // pred_check_branch
          %301 = sbr.rel (%p299) target = $region28
        $region27: #{tpu_custom_call.1} parent=11 // pred_region
          _
        $region28: #{tpu_custom_call.1} parent=11 // pred_fallthru
          _
        // Predicated region
        $region29: #{tpu_custom_call.1} parent=11 // pred_check
          %p302 = pneg %p152
        $region30: #{tpu_custom_call.1} parent=11 // pred_check_branch
          %304 = sbr.rel (%p302) target = $region32
        $region31: #{tpu_custom_call.1} parent=11 // pred_region
          %s306 = ssub.s32 18432, 18432
          %307 = vsyncadd [#allocation6], %s306
          %s308 = sshll.u32 [#allocation5], 4
          %s309 = int_to_ptr.vmem [resolvable:$true] %s308
          %314 = dma.hbm_to_vmem [thread:$0]  %s5, 18432, %s309, [#allocation6], 128, 128, 8
        $region32: #{tpu_custom_call.1} parent=11 // pred_fallthru
          _
        // Predicated region
        $region33: #{tpu_custom_call.1} parent=11 // pred_check
          %p315 = pneg %p173
        $region34: #{tpu_custom_call.1} parent=11 // pred_check_branch
          %317 = sbr.rel (%p315) target = $region36
        $region35: #{tpu_custom_call.1} parent=11 // pred_region
          _
        $region36: #{tpu_custom_call.1} parent=11 // pred_fallthru
          _
        // Predicated region
        $region37: #{tpu_custom_call.1} parent=11 // pred_check
          %p318 = pneg %p220
        $region38: #{tpu_custom_call.1} parent=11 // pred_check_branch
          %320 = sbr.rel (%p318) target = $region40
        $region39: #{tpu_custom_call.1} parent=11 // pred_region
          %s322 = ssub.s32 256, 256
          %323 = vsyncadd [#allocation6], %s322
          %s324 = sshll.u32 [#allocation7], 4
          %s325 = int_to_ptr.vmem [resolvable:$true] %s324
          %330 = dma.hbm_to_vmem [thread:$0]  %s8, 256, %s325, [#allocation6], 128, 128, 8
        $region40: #{tpu_custom_call.1} parent=11 // pred_fallthru
          _
        // Predicated region
        $region41: #{tpu_custom_call.1} parent=11 // pred_check
          %p331 = pneg %p241
        $region42: #{tpu_custom_call.1} parent=11 // pred_check_branch
          %333 = sbr.rel (%p331) target = $region44
        $region43: #{tpu_custom_call.1} parent=11 // pred_region
          _
        $region44: #{tpu_custom_call.1} parent=11 // pred_fallthru
          _
      $region12: #{tpu_custom_call.1} parent=5 // pred_fallthru
        _
      %p334 = scmp.lt.s32.totalorder %s21, 2
      // Predicated region
      $region45: #{tpu_custom_call.1} parent=5 // pred_check
        %p335 = pneg %p334
      $region46: #{tpu_custom_call.1} parent=5 // pred_check_branch
        %337 = sbr.rel (%p335) target = $region48
      $region47: #{tpu_custom_call.1} parent=5 // pred_region
        // Predicated region
        $region49: #{tpu_custom_call.1} parent=47 // pred_check
          %p338 = pneg %p41
        $region50: #{tpu_custom_call.1} parent=47 // pred_check_branch
          %340 = sbr.rel (%p338) target = $region52
        $region51: #{tpu_custom_call.1} parent=47 // pred_region
          %p341 = scmp.lt.s32.totalorder %s21, 1
          %s342 = scalar_select %p341, %s21, 1
          %s343 = smul.addr %s342, 8
          %s344 = smul.addr %s343, 8
          %s345 = scalar_lea.vmem %s0, %s344
        $region52: #{tpu_custom_call.1} parent=47 // pred_fallthru
          _
        // Predicated region
        $region53: #{tpu_custom_call.1} parent=47 // pred_check
          %p346 = pneg %p193
        $region54: #{tpu_custom_call.1} parent=47 // pred_check_branch
          %348 = sbr.rel (%p346) target = $region56
        $region55: #{tpu_custom_call.1} parent=47 // pred_region
          %p349 = scmp.lt.s32.totalorder %s21, 1
          %s350 = scalar_select %p349, %s21, 1
          %s351 = scalar_lea.vmem %s7, %s350
        $region56: #{tpu_custom_call.1} parent=47 // pred_fallthru
          _
      $region48: #{tpu_custom_call.1} parent=5 // pred_fallthru
        _
      %p352 = scmp.le.s32.totalorder 1, %s21
      %p353 = scmp.lt.s32.totalorder %s21, 3
      %p354 = pnand %p352, %p353
      %p355 = pneg %p354
      // Predicated region
      $region57: #{tpu_custom_call.1} parent=5 // pred_check
        _
      $region58: #{tpu_custom_call.1} parent=5 // pred_check_branch
        %357 = sbr.rel (%p354) target = $region60
      $region59: #{tpu_custom_call.1} parent=5 // pred_region
        %s358 = ssub.s32 %s21, 1
        // Predicated region
        $region61: #{tpu_custom_call.1} parent=59 // pred_check
          %p359 = pneg %p89
        $region62: #{tpu_custom_call.1} parent=59 // pred_check_branch
          %361 = sbr.rel (%p359) target = $region64
        $region63: #{tpu_custom_call.1} parent=59 // pred_region
          %362 = dma.done [#allocation3], 16
        $region64: #{tpu_custom_call.1} parent=59 // pred_fallthru
          _
        // Predicated region
        $region65: #{tpu_custom_call.1} parent=59 // pred_check
          %p363 = pneg %p152
        $region66: #{tpu_custom_call.1} parent=59 // pred_check_branch
          %365 = sbr.rel (%p363) target = $region68
        $region67: #{tpu_custom_call.1} parent=59 // pred_region
          %366 = dma.done [#allocation6], 18432
        $region68: #{tpu_custom_call.1} parent=59 // pred_fallthru
          _
        // Predicated region
        $region69: #{tpu_custom_call.1} parent=59 // pred_check
          %p367 = pneg %p220
        $region70: #{tpu_custom_call.1} parent=59 // pred_check_branch
          %369 = sbr.rel (%p367) target = $region72
        $region71: #{tpu_custom_call.1} parent=59 // pred_region
          %370 = dma.done [#allocation6], 256
        $region72: #{tpu_custom_call.1} parent=59 // pred_fallthru
          _
        %p371 = scmp.lt.s32.totalorder %s26, 1
        %s372 = scalar_select %p371, %s26, 1
        %s373 = smul.addr %s372, 8
        %s374 = smul.addr %s373, 8
        %s375 = scalar_lea.vmem %s0, %s374
        %p376 = pneg %p47
        %p377 = pneg %p44
        %p378 = pneg %p68
        %p379 = pneg %p65
        %p380 = pneg %p89
        %p381 = pneg %p86
        %p382 = pneg %p110
        %p383 = pneg %p107
        %p384 = pneg %p131
        %p385 = pneg %p128
        %p386 = pneg %p152
        %p387 = pneg %p149
        %p388 = pneg %p173
        %p389 = pneg %p170
        %p390 = scmp.lt.s32.totalorder %s26, 1
        %s391 = scalar_select %p390, %s26, 1
        %s392 = scalar_lea.vmem %s7, %s391
        %p393 = pneg %p199
        %p394 = pneg %p196
        %p395 = pneg %p220
        %p396 = pneg %p217
        %p397 = pneg %p241
        %p398 = pneg %p238
        %p399 = pneg %p267
        %p400 = pneg %p264
        %s401 = sand.u32 %s254, 1
        %s402 = scalar_lea.sflag [#allocation4], %s401
        %s403 = sand.u32 %s254, 1
        %s404 = smul.addr %s403, 64
        %s405 = scalar_lea.vmem [#allocation8], %s404
        %p406 = scmp.lt.s32.totalorder %s26, 1
        %s407 = scalar_select %p406, %s26, 1
        %s408 = smul.addr %s407, 8
        %s409 = smul.addr %s408, 8
        %s410 = scalar_lea.vmem %s0, %s409
        %p411 = scmp.lt.s32.totalorder %s26, 1
        %s412 = scalar_select %p411, %s26, 1
        %s413 = scalar_lea.vmem %s7, %s412
        %v414 = vld [vmem:[%s410] sm:$0xff]
        %v415 = vld [vmem:[%s410 + $0x8] sm:$0xff]
        %v416 = vld [vmem:[%s410 + $0x10] sm:$0xff]
        %v417 = vld [vmem:[%s410 + $0x18] sm:$0xff]
        %v418 = vld [vmem:[%s410 + $0x20] sm:$0xff]
        %v419 = vld [vmem:[%s410 + $0x28] sm:$0xff]
        %v420 = vld [vmem:[%s410 + $0x30] sm:$0xff]
        %v421 = vld [vmem:[%s410 + $0x38] sm:$0xff]
        %v422 = vld [vmem:[%s1] sm:$0x1]
        %v423 = vld [vmem:[#allocation2] sm:$0x1]
        %v424 = vld [vmem:[%s3] sm:$0xff]
        %v425 = vld [vmem:[%s3 + $0x8] sm:$0xff]
        %v426 = vld [vmem:[%s3 + $0x10] sm:$0xff]
        %v427 = vld [vmem:[%s3 + $0x18] sm:$0xff]
        %v428 = vld [vmem:[%s3 + $0x20] sm:$0xff]
        %v429 = vld [vmem:[%s3 + $0x28] sm:$0xff]
        %v430 = vld [vmem:[%s3 + $0x30] sm:$0xff]
        %v431 = vld [vmem:[%s3 + $0x38] sm:$0xff]
        %v432 = vld [vmem:[%s3 + $0x40] sm:$0xff]
        %v433 = vld [vmem:[%s3 + $0x48] sm:$0xff]
        %v434 = vld [vmem:[%s3 + $0x50] sm:$0xff]
        %v435 = vld [vmem:[%s3 + $0x58] sm:$0xff]
        %v436 = vld [vmem:[%s3 + $0x60] sm:$0xff]
        %v437 = vld [vmem:[%s3 + $0x68] sm:$0xff]
        %v438 = vld [vmem:[%s3 + $0x70] sm:$0xff]
        %v439 = vld [vmem:[%s3 + $0x78] sm:$0xff]
        %v440 = vld [vmem:[%s4] sm:$0xff]
        %v441 = vld [vmem:[%s4 + $0x8] sm:$0xff]
        %v442 = vld [vmem:[%s4 + $0x10] sm:$0xff]
        %v443 = vld [vmem:[%s4 + $0x18] sm:$0xff]
        %v444 = vadd.f32 %v414, %v415
        %v445 = vadd.f32 %v444, %v416
        %v446 = vadd.f32 %v445, %v417
        %v447 = vadd.f32 %v446, %v418
        %v448 = vadd.f32 %v447, %v419
        %v449 = vadd.f32 %v448, %v420
        %v450 = vadd.f32 %v449, %v421
        %v451 = vrot.slane %v450, 4
        %v452 = vadd.f32 %v450, %v451
        %v453 = vrot.slane %v452, 2
        %v454 = vadd.f32 %v452, %v453
        %v455 = vrot.slane %v454, 1
        %v456 = vadd.f32 %v454, %v455
        %457 = vmatprep.subr.mxu0 0.0
        %458 = vmatpush1.msra.mxu0 %v439
        %459 = vmatprep.subr.mxu0 0.0
        %460 = vmatpush1.msra.mxu0 %v438
        %461 = vmatprep.subr.mxu0 0.0
        %462 = vmatpush1.msra.mxu0 %v437
        %463 = vmatprep.subr.mxu0 0.0
        %464 = vmatpush1.msra.mxu0 %v436
        %465 = vmatprep.subr.mxu0 0.0
        %466 = vmatpush1.msra.mxu0 %v435
        %467 = vmatprep.subr.mxu0 0.0
        %468 = vmatpush1.msra.mxu0 %v434
        %469 = vmatprep.subr.mxu0 0.0
        %470 = vmatpush1.msra.mxu0 %v433
        %471 = vmatprep.subr.mxu0 0.0
        %472 = vmatpush1.msra.mxu0 %v432
        %473 = vmatprep.subr.mxu0 0.0
        %474 = vmatpush1.msra.mxu0 %v431
        %475 = vmatprep.subr.mxu0 0.0
        %476 = vmatpush1.msra.mxu0 %v430
        %477 = vmatprep.subr.mxu0 0.0
        %478 = vmatpush1.msra.mxu0 %v429
        %479 = vmatprep.subr.mxu0 0.0
        %480 = vmatpush1.msra.mxu0 %v428
        %481 = vmatprep.subr.mxu0 0.0
        %482 = vmatpush1.msra.mxu0 %v427
        %483 = vmatprep.subr.mxu0 0.0
        %484 = vmatpush1.msra.mxu0 %v426
        %485 = vmatprep.subr.mxu0 0.0
        %486 = vmatpush1.msra.mxu0 %v425
        %487 = vmatprep.subr.mxu0 0.0
        %488 = vmatpush1.msra.mxu0 %v424
        %489 = vmatprep.subr.mxu0 0.0
        %490 = vmatpush2.msra.mxu0 0.0
        %491 = vmatprep.subr.mxu0 0.0
        %492 = vmatpush2.msra.mxu0 0.0
        %493 = vmatprep.subr.mxu0 0.0
        %494 = vmatpush2.msra.mxu0 0.0
        %495 = vmatprep.subr.mxu0 0.0
        %496 = vmatpush2.msra.mxu0 0.0
        %497 = vmatprep.subr.mxu0 0.0
        %498 = vmatpush2.msra.mxu0 0.0
        %499 = vmatprep.subr.mxu0 0.0
        %500 = vmatpush2.msra.mxu0 0.0
        %501 = vmatprep.subr.mxu0 0.0
        %502 = vmatpush2.msra.mxu0 0.0
        %503 = vmatprep.subr.mxu0 0.0
        %504 = vmatpush2.msra.mxu0 0.0
        %505 = vmatprep.subr.mxu0 0.0
        %506 = vmatpush2.msra.mxu0 0.0
        %507 = vmatprep.subr.mxu0 0.0
        %508 = vmatpush2.msra.mxu0 0.0
        %509 = vmatprep.subr.mxu0 0.0
        %510 = vmatpush2.msra.mxu0 0.0
        %511 = vmatprep.subr.mxu0 0.0
        %512 = vmatpush2.msra.mxu0 0.0
        %513 = vmatprep.subr.mxu0 0.0
        %514 = vmatpush2.msra.mxu0 0.0
        %515 = vmatprep.subr.mxu0 0.0
        %516 = vmatpush2.msra.mxu0 0.0
        %517 = vmatprep.subr.mxu0 0.0
        %518 = vmatpush2.msra.mxu0 0.0
        %519 = vmatprep.subr.mxu0 0.0
        %520 = vmatpush2.msra.mxu0 0.0
        %521 = vmatprep.mubr.f32.mxu0 0.0
        %522 = vmatmul.mubr.f32.gmra.mxu0 %v456
        %v523 = vpop.f32.mrf.mxu0
        %v524 = vadd.f32 0.0, %v523
        %v525 = vpop.f32.mrf.mxu0
        %526 = vdwg.mxu0
        %v527 = vrcp.pop 64.0
        %v528 = vmul.f32 %v524, %v527
        %vm529 = vcmask 261120
        %v531 = vsel %vm529, %v528, 0
        %533 = vmatprep.subr.mxu0 0.0
        %534 = vmatpush1.msra.mxu0 0.0
        %535 = vmatprep.subr.mxu0 0.0
        %536 = vmatpush1.msra.mxu0 0.0
        %537 = vmatprep.subr.mxu0 0.0
        %538 = vmatpush1.msra.mxu0 0.0
        %539 = vmatprep.subr.mxu0 0.0
        %540 = vmatpush1.msra.mxu0 0.0
        %541 = vmatprep.subr.mxu0 0.0
        %542 = vmatpush1.msra.mxu0 0.0
        %543 = vmatprep.subr.mxu0 0.0
        %544 = vmatpush1.msra.mxu0 0.0
        %545 = vmatprep.subr.mxu0 0.0
        %546 = vmatpush1.msra.mxu0 0.0
        %547 = vmatprep.subr.mxu0 0.0
        %548 = vmatpush1.msra.mxu0 0.0
        %549 = vmatprep.subr.mxu0 0.0
        %550 = vmatpush1.msra.mxu0 0.0
        %551 = vmatprep.subr.mxu0 0.0
        %552 = vmatpush1.msra.mxu0 0.0
        %553 = vmatprep.subr.mxu0 0.0
        %554 = vmatpush1.msra.mxu0 0.0
        %555 = vmatprep.subr.mxu0 0.0
        %556 = vmatpush1.msra.mxu0 0.0
        %557 = vmatprep.subr.mxu0 0.0
        %558 = vmatpush1.msra.mxu0 %v443
        %559 = vmatprep.subr.mxu0 0.0
        %560 = vmatpush1.msra.mxu0 %v442
        %561 = vmatprep.subr.mxu0 0.0
        %562 = vmatpush1.msra.mxu0 %v441
        %563 = vmatprep.subr.mxu0 0.0
        %564 = vmatpush1.msra.mxu0 %v440
        %565 = vmatprep.subr.mxu0 0.0
        %566 = vmatpush2.msra.mxu0 0.0
        %567 = vmatprep.subr.mxu0 0.0
        %568 = vmatpush2.msra.mxu0 0.0
        %569 = vmatprep.subr.mxu0 0.0
        %570 = vmatpush2.msra.mxu0 0.0
        %571 = vmatprep.subr.mxu0 0.0
        %572 = vmatpush2.msra.mxu0 0.0
        %573 = vmatprep.subr.mxu0 0.0
        %574 = vmatpush2.msra.mxu0 0.0
        %575 = vmatprep.subr.mxu0 0.0
        %576 = vmatpush2.msra.mxu0 0.0
        %577 = vmatprep.subr.mxu0 0.0
        %578 = vmatpush2.msra.mxu0 0.0
        %579 = vmatprep.subr.mxu0 0.0
        %580 = vmatpush2.msra.mxu0 0.0
        %581 = vmatprep.subr.mxu0 0.0
        %582 = vmatpush2.msra.mxu0 0.0
        %583 = vmatprep.subr.mxu0 0.0
        %584 = vmatpush2.msra.mxu0 0.0
        %585 = vmatprep.subr.mxu0 0.0
        %586 = vmatpush2.msra.mxu0 0.0
        %587 = vmatprep.subr.mxu0 0.0
        %588 = vmatpush2.msra.mxu0 0.0
        %589 = vmatprep.subr.mxu0 0.0
        %590 = vmatpush2.msra.mxu0 0.0
        %591 = vmatprep.subr.mxu0 0.0
        %592 = vmatpush2.msra.mxu0 0.0
        %593 = vmatprep.subr.mxu0 0.0
        %594 = vmatpush2.msra.mxu0 0.0
        %595 = vmatprep.subr.mxu0 0.0
        %596 = vmatpush2.msra.mxu0 0.0
        %597 = vmatprep.mubr.f32.mxu0 0.0
        %598 = vmatmul.mubr.f32.gmra.mxu0 %v531
        %v599 = vpop.f32.mrf.mxu0
        %v600 = vadd.f32 0.0, %v599
        %v601 = vpop.f32.mrf.mxu0
        %602 = vdwg.mxu0
        %v603 = vlaneseq
        %v604 = vshrl.u32 %v603, 7
        %v605 = vsub.s32 0, %v604
        %v606 = vrot.slane %v600, %v605
        %v607 = vsub.f32 %v414, %v606
        %v608 = vsub.f32 %v415, %v606
        %v609 = vsub.f32 %v416, %v606
        %v610 = vsub.f32 %v417, %v606
        %v611 = vsub.f32 %v418, %v606
        %v612 = vsub.f32 %v419, %v606
        %v613 = vsub.f32 %v420, %v606
        %v614 = vsub.f32 %v421, %v606
        %v615 = vmul.f32 %v607, %v607
        %v616 = vmul.f32 %v608, %v608
        %v617 = vmul.f32 %v609, %v609
        %v618 = vmul.f32 %v610, %v610
        %v619 = vmul.f32 %v611, %v611
        %v620 = vmul.f32 %v612, %v612
        %v621 = vmul.f32 %v613, %v613
        %v622 = vmul.f32 %v614, %v614
        %v623 = vadd.f32 %v615, %v616
        %v624 = vadd.f32 %v623, %v617
        %v625 = vadd.f32 %v624, %v618
        %v626 = vadd.f32 %v625, %v619
        %v627 = vadd.f32 %v626, %v620
        %v628 = vadd.f32 %v627, %v621
        %v629 = vadd.f32 %v628, %v622
        %v630 = vrot.slane %v629, 4
        %v631 = vadd.f32 %v629, %v630
        %v632 = vrot.slane %v631, 2
        %v633 = vadd.f32 %v631, %v632
        %v634 = vrot.slane %v633, 1
        %v635 = vadd.f32 %v633, %v634
        %636 = vmatprep.subr.mxu0 0.0
        %637 = vmatpush1.msra.mxu0 %v439
        %638 = vmatprep.subr.mxu0 0.0
        %639 = vmatpush1.msra.mxu0 %v438
        %640 = vmatprep.subr.mxu0 0.0
        %641 = vmatpush1.msra.mxu0 %v437
        %642 = vmatprep.subr.mxu0 0.0
        %643 = vmatpush1.msra.mxu0 %v436
        %644 = vmatprep.subr.mxu0 0.0
        %645 = vmatpush1.msra.mxu0 %v435
        %646 = vmatprep.subr.mxu0 0.0
        %647 = vmatpush1.msra.mxu0 %v434
        %648 = vmatprep.subr.mxu0 0.0
        %649 = vmatpush1.msra.mxu0 %v433
        %650 = vmatprep.subr.mxu0 0.0
        %651 = vmatpush1.msra.mxu0 %v432
        %652 = vmatprep.subr.mxu0 0.0
        %653 = vmatpush1.msra.mxu0 %v431
        %654 = vmatprep.subr.mxu0 0.0
        %655 = vmatpush1.msra.mxu0 %v430
        %656 = vmatprep.subr.mxu0 0.0
        %657 = vmatpush1.msra.mxu0 %v429
        %658 = vmatprep.subr.mxu0 0.0
        %659 = vmatpush1.msra.mxu0 %v428
        %660 = vmatprep.subr.mxu0 0.0
        %661 = vmatpush1.msra.mxu0 %v427
        %662 = vmatprep.subr.mxu0 0.0
        %663 = vmatpush1.msra.mxu0 %v426
        %664 = vmatprep.subr.mxu0 0.0
        %665 = vmatpush1.msra.mxu0 %v425
        %666 = vmatprep.subr.mxu0 0.0
        %667 = vmatpush1.msra.mxu0 %v424
        %668 = vmatprep.subr.mxu0 0.0
        %669 = vmatpush2.msra.mxu0 0.0
        %670 = vmatprep.subr.mxu0 0.0
        %671 = vmatpush2.msra.mxu0 0.0
        %672 = vmatprep.subr.mxu0 0.0
        %673 = vmatpush2.msra.mxu0 0.0
        %674 = vmatprep.subr.mxu0 0.0
        %675 = vmatpush2.msra.mxu0 0.0
        %676 = vmatprep.subr.mxu0 0.0
        %677 = vmatpush2.msra.mxu0 0.0
        %678 = vmatprep.subr.mxu0 0.0
        %679 = vmatpush2.msra.mxu0 0.0
        %680 = vmatprep.subr.mxu0 0.0
        %681 = vmatpush2.msra.mxu0 0.0
        %682 = vmatprep.subr.mxu0 0.0
        %683 = vmatpush2.msra.mxu0 0.0
        %684 = vmatprep.subr.mxu0 0.0
        %685 = vmatpush2.msra.mxu0 0.0
        %686 = vmatprep.subr.mxu0 0.0
        %687 = vmatpush2.msra.mxu0 0.0
        %688 = vmatprep.subr.mxu0 0.0
        %689 = vmatpush2.msra.mxu0 0.0
        %690 = vmatprep.subr.mxu0 0.0
        %691 = vmatpush2.msra.mxu0 0.0
        %692 = vmatprep.subr.mxu0 0.0
        %693 = vmatpush2.msra.mxu0 0.0
        %694 = vmatprep.subr.mxu0 0.0
        %695 = vmatpush2.msra.mxu0 0.0
        %696 = vmatprep.subr.mxu0 0.0
        %697 = vmatpush2.msra.mxu0 0.0
        %698 = vmatprep.subr.mxu0 0.0
        %699 = vmatpush2.msra.mxu0 0.0
        %700 = vmatprep.mubr.f32.mxu0 0.0
        %701 = vmatmul.mubr.f32.gmra.mxu0 %v635
        %v702 = vpop.f32.mrf.mxu0
        %v703 = vadd.f32 0.0, %v702
        %v704 = vpop.f32.mrf.mxu0
        %705 = vdwg.mxu0
        %v706 = vmul.f32 %v703, %v527
        %v707 = vadd.f32 %v706, 1e-05
        %v708 = vrsqrt.pop %v707
        %v710 = vsel %vm529, %v708, 0
        %712 = vmatprep.subr.mxu0 0.0
        %713 = vmatpush1.msra.mxu0 0.0
        %714 = vmatprep.subr.mxu0 0.0
        %715 = vmatpush1.msra.mxu0 0.0
        %716 = vmatprep.subr.mxu0 0.0
        %717 = vmatpush1.msra.mxu0 0.0
        %718 = vmatprep.subr.mxu0 0.0
        %719 = vmatpush1.msra.mxu0 0.0
        %720 = vmatprep.subr.mxu0 0.0
        %721 = vmatpush1.msra.mxu0 0.0
        %722 = vmatprep.subr.mxu0 0.0
        %723 = vmatpush1.msra.mxu0 0.0
        %724 = vmatprep.subr.mxu0 0.0
        %725 = vmatpush1.msra.mxu0 0.0
        %726 = vmatprep.subr.mxu0 0.0
        %727 = vmatpush1.msra.mxu0 0.0
        %728 = vmatprep.subr.mxu0 0.0
        %729 = vmatpush1.msra.mxu0 0.0
        %730 = vmatprep.subr.mxu0 0.0
        %731 = vmatpush1.msra.mxu0 0.0
        %732 = vmatprep.subr.mxu0 0.0
        %733 = vmatpush1.msra.mxu0 0.0
        %734 = vmatprep.subr.mxu0 0.0
        %735 = vmatpush1.msra.mxu0 0.0
        %736 = vmatprep.subr.mxu0 0.0
        %737 = vmatpush1.msra.mxu0 %v443
        %738 = vmatprep.subr.mxu0 0.0
        %739 = vmatpush1.msra.mxu0 %v442
        %740 = vmatprep.subr.mxu0 0.0
        %741 = vmatpush1.msra.mxu0 %v441
        %742 = vmatprep.subr.mxu0 0.0
        %743 = vmatpush1.msra.mxu0 %v440
        %744 = vmatprep.subr.mxu0 0.0
        %745 = vmatpush2.msra.mxu0 0.0
        %746 = vmatprep.subr.mxu0 0.0
        %747 = vmatpush2.msra.mxu0 0.0
        %748 = vmatprep.subr.mxu0 0.0
        %749 = vmatpush2.msra.mxu0 0.0
        %750 = vmatprep.subr.mxu0 0.0
        %751 = vmatpush2.msra.mxu0 0.0
        %752 = vmatprep.subr.mxu0 0.0
        %753 = vmatpush2.msra.mxu0 0.0
        %754 = vmatprep.subr.mxu0 0.0
        %755 = vmatpush2.msra.mxu0 0.0
        %756 = vmatprep.subr.mxu0 0.0
        %757 = vmatpush2.msra.mxu0 0.0
        %758 = vmatprep.subr.mxu0 0.0
        %759 = vmatpush2.msra.mxu0 0.0
        %760 = vmatprep.subr.mxu0 0.0
        %761 = vmatpush2.msra.mxu0 0.0
        %762 = vmatprep.subr.mxu0 0.0
        %763 = vmatpush2.msra.mxu0 0.0
        %764 = vmatprep.subr.mxu0 0.0
        %765 = vmatpush2.msra.mxu0 0.0
        %766 = vmatprep.subr.mxu0 0.0
        %767 = vmatpush2.msra.mxu0 0.0
        %768 = vmatprep.subr.mxu0 0.0
        %769 = vmatpush2.msra.mxu0 0.0
        %770 = vmatprep.subr.mxu0 0.0
        %771 = vmatpush2.msra.mxu0 0.0
        %772 = vmatprep.subr.mxu0 0.0
        %773 = vmatpush2.msra.mxu0 0.0
        %774 = vmatprep.subr.mxu0 0.0
        %775 = vmatpush2.msra.mxu0 0.0
        %776 = vmatprep.mubr.f32.mxu0 0.0
        %777 = vmatmul.mubr.f32.gmra.mxu0 %v710
        %v778 = vpop.f32.mrf.mxu0
        %v779 = vadd.f32 0.0, %v778
        %v780 = vpop.f32.mrf.mxu0
        %781 = vdwg.mxu0
        %v782 = vlaneseq
        %v783 = vshrl.u32 %v782, 7
        %v784 = vsub.s32 0, %v783
        %v785 = vrot.slane %v779, %v784
        %v786 = vmul.f32 %v607, %v785
        %v787 = vmul.f32 %v608, %v785
        %v788 = vmul.f32 %v609, %v785
        %v789 = vmul.f32 %v610, %v785
        %v790 = vmul.f32 %v611, %v785
        %v791 = vmul.f32 %v612, %v785
        %v792 = vmul.f32 %v613, %v785
        %v793 = vmul.f32 %v614, %v785
        %v795 = vlaneseq
        %v796 = vshrl.u32 %v795, 7
        %v797 = vsub.s32 0, %v796
        %v798 = vrot.slane %v422, %v797
        %v800 = vmul.f32 %v786, %v798
        %v801 = vmul.f32 %v787, %v798
        %v802 = vmul.f32 %v788, %v798
        %v803 = vmul.f32 %v789, %v798
        %v804 = vmul.f32 %v790, %v798
        %v805 = vmul.f32 %v791, %v798
        %v806 = vmul.f32 %v792, %v798
        %v807 = vmul.f32 %v793, %v798
        %v809 = vlaneseq
        %v810 = vshrl.u32 %v809, 7
        %v811 = vsub.s32 0, %v810
        %v812 = vrot.slane %v423, %v811
        %v814 = vadd.f32 %v800, %v812
        %v815 = vadd.f32 %v801, %v812
        %v816 = vadd.f32 %v802, %v812
        %v817 = vadd.f32 %v803, %v812
        %v818 = vadd.f32 %v804, %v812
        %v819 = vadd.f32 %v805, %v812
        %v820 = vadd.f32 %v806, %v812
        %v821 = vadd.f32 %v807, %v812
        %v822 = vsub.f32 0.0, %v814
        %v823 = vsub.f32 0.0, %v815
        %v824 = vsub.f32 0.0, %v816
        %v825 = vsub.f32 0.0, %v817
        %v826 = vsub.f32 0.0, %v818
        %v827 = vsub.f32 0.0, %v819
        %v828 = vsub.f32 0.0, %v820
        %v829 = vsub.f32 0.0, %v821
        %v830 = vmul.f32 %v822, 1.442695
        %v831 = vpow.pop %v830
        %v832 = vmul.f32 %v823, 1.442695
        %v833 = vpow.pop %v832
        %v834 = vmul.f32 %v824, 1.442695
        %v835 = vpow.pop %v834
        %v836 = vmul.f32 %v825, 1.442695
        %v837 = vpow.pop %v836
        %v838 = vmul.f32 %v826, 1.442695
        %v839 = vpow.pop %v838
        %v840 = vmul.f32 %v827, 1.442695
        %v841 = vpow.pop %v840
        %v842 = vmul.f32 %v828, 1.442695
        %v843 = vpow.pop %v842
        %v844 = vmul.f32 %v829, 1.442695
        %v845 = vpow.pop %v844
        %v846 = vadd.f32 %v831, 1.0
        %v847 = vadd.f32 %v833, 1.0
        %v848 = vadd.f32 %v835, 1.0
        %v849 = vadd.f32 %v837, 1.0
        %v850 = vadd.f32 %v839, 1.0
        %v851 = vadd.f32 %v841, 1.0
        %v852 = vadd.f32 %v843, 1.0
        %v853 = vadd.f32 %v845, 1.0
        %v854 = vrcp.pop %v846
        %v855 = vmul.f32 1.0, %v854
        %v856 = vrcp.pop %v847
        %v857 = vmul.f32 1.0, %v856
        %v858 = vrcp.pop %v848
        %v859 = vmul.f32 1.0, %v858
        %v860 = vrcp.pop %v849
        %v861 = vmul.f32 1.0, %v860
        %v862 = vrcp.pop %v850
        %v863 = vmul.f32 1.0, %v862
        %v864 = vrcp.pop %v851
        %v865 = vmul.f32 1.0, %v864
        %v866 = vrcp.pop %v852
        %v867 = vmul.f32 1.0, %v866
        %v868 = vrcp.pop %v853
        %v869 = vmul.f32 1.0, %v868
        %v870 = vmul.f32 %v814, %v855
        %v871 = vmul.f32 %v815, %v857
        %v872 = vmul.f32 %v816, %v859
        %v873 = vmul.f32 %v817, %v861
        %v874 = vmul.f32 %v818, %v863
        %v875 = vmul.f32 %v819, %v865
        %v876 = vmul.f32 %v820, %v867
        %v877 = vmul.f32 %v821, %v869
        %v886 = vrot.slane 0.0, 7
        %v887 = vrot.slane %v870, 7
        %v888 = vrot.slane %v871, 7
        %v889 = vrot.slane %v872, 7
        %v890 = vrot.slane %v873, 7
        %v891 = vrot.slane %v874, 7
        %v892 = vrot.slane %v875, 7
        %v893 = vrot.slane %v876, 7
        %vm902 = vcmask 1040384
        %v903 = vsel %vm902, 0.0, %v886
        %v904 = vsel %vm902, 0.0, %v887
        %v905 = vsel %vm902, 0.0, %v888
        %v906 = vsel %vm902, 0.0, %v889
        %v907 = vsel %vm902, 0.0, %v890
        %v908 = vsel %vm902, 0.0, %v891
        %v909 = vsel %vm902, 0.0, %v892
        %v910 = vsel %vm902, 0.0, %v893
        %v911 = vld [vmem:[#allocation5] sm:$0xff]
        %v912 = vld [vmem:[#allocation5 + $0x8] sm:$0xff]
        %v913 = vld [vmem:[#allocation5 + $0x10] sm:$0xff]
        %v914 = vld [vmem:[#allocation5 + $0x18] sm:$0xff]
        %v915 = vld [vmem:[#allocation5 + $0x20] sm:$0xff]
        %v916 = vld [vmem:[#allocation5 + $0x28] sm:$0xff]
        %v917 = vld [vmem:[#allocation5 + $0x30] sm:$0xff]
        %v918 = vld [vmem:[#allocation5 + $0x38] sm:$0xff]
        %v919 = vld [vmem:[#allocation5 + $0x40] sm:$0xff]
        %v920 = vld [vmem:[#allocation5 + $0x48] sm:$0xff]
        %v921 = vld [vmem:[#allocation5 + $0x50] sm:$0xff]
        %v922 = vld [vmem:[#allocation5 + $0x58] sm:$0xff]
        %v923 = vld [vmem:[#allocation5 + $0x60] sm:$0xff]
        %v924 = vld [vmem:[#allocation5 + $0x68] sm:$0xff]
        %v925 = vld [vmem:[#allocation5 + $0x70] sm:$0xff]
        %v926 = vld [vmem:[#allocation5 + $0x78] sm:$0xff]
        %s927 = scalar_lea.vmem [#allocation5], 128
        %v928 = vld [vmem:[%s927] sm:$0xff]
        %v929 = vld [vmem:[%s927 + $0x8] sm:$0xff]
        %v930 = vld [vmem:[%s927 + $0x10] sm:$0xff]
        %v931 = vld [vmem:[%s927 + $0x18] sm:$0xff]
        %v932 = vld [vmem:[%s927 + $0x20] sm:$0xff]
        %v933 = vld [vmem:[%s927 + $0x28] sm:$0xff]
        %v934 = vld [vmem:[%s927 + $0x30] sm:$0xff]
        %v935 = vld [vmem:[%s927 + $0x38] sm:$0xff]
        %v936 = vld [vmem:[%s927 + $0x40] sm:$0xff]
        %v937 = vld [vmem:[%s927 + $0x48] sm:$0xff]
        %v938 = vld [vmem:[%s927 + $0x50] sm:$0xff]
        %v939 = vld [vmem:[%s927 + $0x58] sm:$0xff]
        %v940 = vld [vmem:[%s927 + $0x60] sm:$0xff]
        %v941 = vld [vmem:[%s927 + $0x68] sm:$0xff]
        %v942 = vld [vmem:[%s927 + $0x70] sm:$0xff]
        %v943 = vld [vmem:[%s927 + $0x78] sm:$0xff]
        %944 = vmatprep.subr.mxu0 0.0
        %945 = vmatpush1.msra.mxu0 %v943
        %946 = vmatprep.subr.mxu0 0.0
        %947 = vmatpush1.msra.mxu0 %v942
        %948 = vmatprep.subr.mxu0 0.0
        %949 = vmatpush1.msra.mxu0 %v941
        %950 = vmatprep.subr.mxu0 0.0
        %951 = vmatpush1.msra.mxu0 %v940
        %952 = vmatprep.subr.mxu0 0.0
        %953 = vmatpush1.msra.mxu0 %v939
        %954 = vmatprep.subr.mxu0 0.0
        %955 = vmatpush1.msra.mxu0 %v938
        %956 = vmatprep.subr.mxu0 0.0
        %957 = vmatpush1.msra.mxu0 %v937
        %958 = vmatprep.subr.mxu0 0.0
        %959 = vmatpush1.msra.mxu0 %v936
        %960 = vmatprep.subr.mxu0 0.0
        %961 = vmatpush1.msra.mxu0 %v935
        %962 = vmatprep.subr.mxu0 0.0
        %963 = vmatpush1.msra.mxu0 %v934
        %964 = vmatprep.subr.mxu0 0.0
        %965 = vmatpush1.msra.mxu0 %v933
        %966 = vmatprep.subr.mxu0 0.0
        %967 = vmatpush1.msra.mxu0 %v932
        %968 = vmatprep.subr.mxu0 0.0
        %969 = vmatpush1.msra.mxu0 %v931
        %970 = vmatprep.subr.mxu0 0.0
        %971 = vmatpush1.msra.mxu0 %v930
        %972 = vmatprep.subr.mxu0 0.0
        %973 = vmatpush1.msra.mxu0 %v929
        %974 = vmatprep.subr.mxu0 0.0
        %975 = vmatpush1.msra.mxu0 %v928
        %976 = vmatprep.subr.mxu0 0.0
        %977 = vmatpush2.msra.mxu0 0.0
        %978 = vmatprep.subr.mxu0 0.0
        %979 = vmatpush2.msra.mxu0 0.0
        %980 = vmatprep.subr.mxu0 0.0
        %981 = vmatpush2.msra.mxu0 0.0
        %982 = vmatprep.subr.mxu0 0.0
        %983 = vmatpush2.msra.mxu0 0.0
        %984 = vmatprep.subr.mxu0 0.0
        %985 = vmatpush2.msra.mxu0 0.0
        %986 = vmatprep.subr.mxu0 0.0
        %987 = vmatpush2.msra.mxu0 0.0
        %988 = vmatprep.subr.mxu0 0.0
        %989 = vmatpush2.msra.mxu0 0.0
        %990 = vmatprep.subr.mxu0 0.0
        %991 = vmatpush2.msra.mxu0 0.0
        %992 = vmatprep.subr.mxu0 0.0
        %993 = vmatpush2.msra.mxu0 0.0
        %994 = vmatprep.subr.mxu0 0.0
        %995 = vmatpush2.msra.mxu0 0.0
        %996 = vmatprep.subr.mxu0 0.0
        %997 = vmatpush2.msra.mxu0 0.0
        %998 = vmatprep.subr.mxu0 0.0
        %999 = vmatpush2.msra.mxu0 0.0
        %1000 = vmatprep.subr.mxu0 0.0
        %1001 = vmatpush2.msra.mxu0 0.0
        %1002 = vmatprep.subr.mxu0 0.0
        %1003 = vmatpush2.msra.mxu0 0.0
        %1004 = vmatprep.subr.mxu0 0.0
        %1005 = vmatpush2.msra.mxu0 0.0
        %1006 = vmatprep.subr.mxu0 0.0
        %1007 = vmatpush2.msra.mxu0 0.0
        %1008 = vmatprep.mubr.f32.mxu0 0.0
        %1009 = vmatmul.mubr.f32.gmra.mxu0 0.0
        %v1010 = vpop.f32.mrf.mxu0
        %v1011 = vadd.f32 0.0, %v1010
        %v1012 = vpop.f32.mrf.mxu0
        %1013 = vmatprep.mubr.f32.mxu0 0.0
        %1014 = vmatmul.mubr.f32.gmra.mxu0 %v870
        %v1015 = vpop.f32.mrf.mxu0
        %v1016 = vadd.f32 0.0, %v1015
        %v1017 = vpop.f32.mrf.mxu0
        %1018 = vmatprep.mubr.f32.mxu0 0.0
        %1019 = vmatmul.mubr.f32.gmra.mxu0 %v871
        %v1020 = vpop.f32.mrf.mxu0
        %v1021 = vadd.f32 0.0, %v1020
        %v1022 = vpop.f32.mrf.mxu0
        %1023 = vmatprep.mubr.f32.mxu0 0.0
        %1024 = vmatmul.mubr.f32.gmra.mxu0 %v872
        %v1025 = vpop.f32.mrf.mxu0
        %v1026 = vadd.f32 0.0, %v1025
        %v1027 = vpop.f32.mrf.mxu0
        %1028 = vmatprep.mubr.f32.mxu0 0.0
        %1029 = vmatmul.mubr.f32.gmra.mxu0 %v873
        %v1030 = vpop.f32.mrf.mxu0
        %v1031 = vadd.f32 0.0, %v1030
        %v1032 = vpop.f32.mrf.mxu0
        %1033 = vmatprep.mubr.f32.mxu0 0.0
        %1034 = vmatmul.mubr.f32.gmra.mxu0 %v874
        %v1035 = vpop.f32.mrf.mxu0
        %v1036 = vadd.f32 0.0, %v1035
        %v1037 = vpop.f32.mrf.mxu0
        %1038 = vmatprep.mubr.f32.mxu0 0.0
        %1039 = vmatmul.mubr.f32.gmra.mxu0 %v875
        %v1040 = vpop.f32.mrf.mxu0
        %v1041 = vadd.f32 0.0, %v1040
        %v1042 = vpop.f32.mrf.mxu0
        %1043 = vmatprep.mubr.f32.mxu0 0.0
        %1044 = vmatmul.mubr.f32.gmra.mxu0 %v876
        %v1045 = vpop.f32.mrf.mxu0
        %v1046 = vadd.f32 0.0, %v1045
        %v1047 = vpop.f32.mrf.mxu0
        %1048 = vdwg.mxu0
        %1049 = vmatprep.subr.mxu0 0.0
        %1050 = vmatpush1.msra.mxu0 %v926
        %1051 = vmatprep.subr.mxu0 0.0
        %1052 = vmatpush1.msra.mxu0 %v925
        %1053 = vmatprep.subr.mxu0 0.0
        %1054 = vmatpush1.msra.mxu0 %v924
        %1055 = vmatprep.subr.mxu0 0.0
        %1056 = vmatpush1.msra.mxu0 %v923
        %1057 = vmatprep.subr.mxu0 0.0
        %1058 = vmatpush1.msra.mxu0 %v922
        %1059 = vmatprep.subr.mxu0 0.0
        %1060 = vmatpush1.msra.mxu0 %v921
        %1061 = vmatprep.subr.mxu0 0.0
        %1062 = vmatpush1.msra.mxu0 %v920
        %1063 = vmatprep.subr.mxu0 0.0
        %1064 = vmatpush1.msra.mxu0 %v919
        %1065 = vmatprep.subr.mxu0 0.0
        %1066 = vmatpush1.msra.mxu0 %v918
        %1067 = vmatprep.subr.mxu0 0.0
        %1068 = vmatpush1.msra.mxu0 %v917
        %1069 = vmatprep.subr.mxu0 0.0
        %1070 = vmatpush1.msra.mxu0 %v916
        %1071 = vmatprep.subr.mxu0 0.0
        %1072 = vmatpush1.msra.mxu0 %v915
        %1073 = vmatprep.subr.mxu0 0.0
        %1074 = vmatpush1.msra.mxu0 %v914
        %1075 = vmatprep.subr.mxu0 0.0
        %1076 = vmatpush1.msra.mxu0 %v913
        %1077 = vmatprep.subr.mxu0 0.0
        %1078 = vmatpush1.msra.mxu0 %v912
        %1079 = vmatprep.subr.mxu0 0.0
        %1080 = vmatpush1.msra.mxu0 %v911
        %1081 = vmatprep.subr.mxu0 0.0
        %1082 = vmatpush2.msra.mxu0 0.0
        %1083 = vmatprep.subr.mxu0 0.0
        %1084 = vmatpush2.msra.mxu0 0.0
        %1085 = vmatprep.subr.mxu0 0.0
        %1086 = vmatpush2.msra.mxu0 0.0
        %1087 = vmatprep.subr.mxu0 0.0
        %1088 = vmatpush2.msra.mxu0 0.0
        %1089 = vmatprep.subr.mxu0 0.0
        %1090 = vmatpush2.msra.mxu0 0.0
        %1091 = vmatprep.subr.mxu0 0.0
        %1092 = vmatpush2.msra.mxu0 0.0
        %1093 = vmatprep.subr.mxu0 0.0
        %1094 = vmatpush2.msra.mxu0 0.0
        %1095 = vmatprep.subr.mxu0 0.0
        %1096 = vmatpush2.msra.mxu0 0.0
        %1097 = vmatprep.subr.mxu0 0.0
        %1098 = vmatpush2.msra.mxu0 0.0
        %1099 = vmatprep.subr.mxu0 0.0
        %1100 = vmatpush2.msra.mxu0 0.0
        %1101 = vmatprep.subr.mxu0 0.0
        %1102 = vmatpush2.msra.mxu0 0.0
        %1103 = vmatprep.subr.mxu0 0.0
        %1104 = vmatpush2.msra.mxu0 0.0
        %1105 = vmatprep.subr.mxu0 0.0
        %1106 = vmatpush2.msra.mxu0 0.0
        %1107 = vmatprep.subr.mxu0 0.0
        %1108 = vmatpush2.msra.mxu0 0.0
        %1109 = vmatprep.subr.mxu0 0.0
        %1110 = vmatpush2.msra.mxu0 0.0
        %1111 = vmatprep.subr.mxu0 0.0
        %1112 = vmatpush2.msra.mxu0 0.0
        %1113 = vmatprep.mubr.f32.mxu0 0.0
        %1114 = vmatmul.mubr.f32.gmra.mxu0 %v903
        %v1115 = vpop.f32.mrf.mxu0
        %v1116 = vadd.f32 %v1011, %v1115
        %v1117 = vpop.f32.mrf.mxu0
        %1118 = vmatprep.mubr.f32.mxu0 0.0
        %1119 = vmatmul.mubr.f32.gmra.mxu0 %v904
        %v1120 = vpop.f32.mrf.mxu0
        %v1121 = vadd.f32 %v1016, %v1120
        %v1122 = vpop.f32.mrf.mxu0
        %1123 = vmatprep.mubr.f32.mxu0 0.0
        %1124 = vmatmul.mubr.f32.gmra.mxu0 %v905
        %v1125 = vpop.f32.mrf.mxu0
        %v1126 = vadd.f32 %v1021, %v1125
        %v1127 = vpop.f32.mrf.mxu0
        %1128 = vmatprep.mubr.f32.mxu0 0.0
        %1129 = vmatmul.mubr.f32.gmra.mxu0 %v906
        %v1130 = vpop.f32.mrf.mxu0
        %v1131 = vadd.f32 %v1026, %v1130
        %v1132 = vpop.f32.mrf.mxu0
        %1133 = vmatprep.mubr.f32.mxu0 0.0
        %1134 = vmatmul.mubr.f32.gmra.mxu0 %v907
        %v1135 = vpop.f32.mrf.mxu0
        %v1136 = vadd.f32 %v1031, %v1135
        %v1137 = vpop.f32.mrf.mxu0
        %1138 = vmatprep.mubr.f32.mxu0 0.0
        %1139 = vmatmul.mubr.f32.gmra.mxu0 %v908
        %v1140 = vpop.f32.mrf.mxu0
        %v1141 = vadd.f32 %v1036, %v1140
        %v1142 = vpop.f32.mrf.mxu0
        %1143 = vmatprep.mubr.f32.mxu0 0.0
        %1144 = vmatmul.mubr.f32.gmra.mxu0 %v909
        %v1145 = vpop.f32.mrf.mxu0
        %v1146 = vadd.f32 %v1041, %v1145
        %v1147 = vpop.f32.mrf.mxu0
        %1148 = vmatprep.mubr.f32.mxu0 0.0
        %1149 = vmatmul.mubr.f32.gmra.mxu0 %v910
        %v1150 = vpop.f32.mrf.mxu0
        %v1151 = vadd.f32 %v1046, %v1150
        %v1152 = vpop.f32.mrf.mxu0
        %1153 = vdwg.mxu0
        %v1154 = vrot.slane 0.0, 1
        %v1155 = vrot.slane %v870, 1
        %v1156 = vrot.slane %v871, 1
        %v1157 = vrot.slane %v872, 1
        %v1158 = vrot.slane %v873, 1
        %v1159 = vrot.slane %v874, 1
        %v1160 = vrot.slane %v875, 1
        %v1161 = vrot.slane %v876, 1
        %vm1170 = vcmask 1046528
        %v1171 = vsel %vm1170, %v1154, 0.0
        %v1172 = vsel %vm1170, %v1155, 0.0
        %v1173 = vsel %vm1170, %v1156, 0.0
        %v1174 = vsel %vm1170, %v1157, 0.0
        %v1175 = vsel %vm1170, %v1158, 0.0
        %v1176 = vsel %vm1170, %v1159, 0.0
        %v1177 = vsel %vm1170, %v1160, 0.0
        %v1178 = vsel %vm1170, %v1161, 0.0
        %s1179 = scalar_lea.vmem [#allocation5], 256
        %v1180 = vld [vmem:[%s1179] sm:$0xff]
        %v1181 = vld [vmem:[%s1179 + $0x8] sm:$0xff]
        %v1182 = vld [vmem:[%s1179 + $0x10] sm:$0xff]
        %v1183 = vld [vmem:[%s1179 + $0x18] sm:$0xff]
        %v1184 = vld [vmem:[%s1179 + $0x20] sm:$0xff]
        %v1185 = vld [vmem:[%s1179 + $0x28] sm:$0xff]
        %v1186 = vld [vmem:[%s1179 + $0x30] sm:$0xff]
        %v1187 = vld [vmem:[%s1179 + $0x38] sm:$0xff]
        %v1188 = vld [vmem:[%s1179 + $0x40] sm:$0xff]
        %v1189 = vld [vmem:[%s1179 + $0x48] sm:$0xff]
        %v1190 = vld [vmem:[%s1179 + $0x50] sm:$0xff]
        %v1191 = vld [vmem:[%s1179 + $0x58] sm:$0xff]
        %v1192 = vld [vmem:[%s1179 + $0x60] sm:$0xff]
        %v1193 = vld [vmem:[%s1179 + $0x68] sm:$0xff]
        %v1194 = vld [vmem:[%s1179 + $0x70] sm:$0xff]
        %v1195 = vld [vmem:[%s1179 + $0x78] sm:$0xff]
        %1196 = vmatprep.subr.mxu0 0.0
        %1197 = vmatpush1.msra.mxu0 %v1195
        %1198 = vmatprep.subr.mxu0 0.0
        %1199 = vmatpush1.msra.mxu0 %v1194
        %1200 = vmatprep.subr.mxu0 0.0
        %1201 = vmatpush1.msra.mxu0 %v1193
        %1202 = vmatprep.subr.mxu0 0.0
        %1203 = vmatpush1.msra.mxu0 %v1192
        %1204 = vmatprep.subr.mxu0 0.0
        %1205 = vmatpush1.msra.mxu0 %v1191
        %1206 = vmatprep.subr.mxu0 0.0
        %1207 = vmatpush1.msra.mxu0 %v1190
        %1208 = vmatprep.subr.mxu0 0.0
        %1209 = vmatpush1.msra.mxu0 %v1189
        %1210 = vmatprep.subr.mxu0 0.0
        %1211 = vmatpush1.msra.mxu0 %v1188
        %1212 = vmatprep.subr.mxu0 0.0
        %1213 = vmatpush1.msra.mxu0 %v1187
        %1214 = vmatprep.subr.mxu0 0.0
        %1215 = vmatpush1.msra.mxu0 %v1186
        %1216 = vmatprep.subr.mxu0 0.0
        %1217 = vmatpush1.msra.mxu0 %v1185
        %1218 = vmatprep.subr.mxu0 0.0
        %1219 = vmatpush1.msra.mxu0 %v1184
        %1220 = vmatprep.subr.mxu0 0.0
        %1221 = vmatpush1.msra.mxu0 %v1183
        %1222 = vmatprep.subr.mxu0 0.0
        %1223 = vmatpush1.msra.mxu0 %v1182
        %1224 = vmatprep.subr.mxu0 0.0
        %1225 = vmatpush1.msra.mxu0 %v1181
        %1226 = vmatprep.subr.mxu0 0.0
        %1227 = vmatpush1.msra.mxu0 %v1180
        %1228 = vmatprep.subr.mxu0 0.0
        %1229 = vmatpush2.msra.mxu0 0.0
        %1230 = vmatprep.subr.mxu0 0.0
        %1231 = vmatpush2.msra.mxu0 0.0
        %1232 = vmatprep.subr.mxu0 0.0
        %1233 = vmatpush2.msra.mxu0 0.0
        %1234 = vmatprep.subr.mxu0 0.0
        %1235 = vmatpush2.msra.mxu0 0.0
        %1236 = vmatprep.subr.mxu0 0.0
        %1237 = vmatpush2.msra.mxu0 0.0
        %1238 = vmatprep.subr.mxu0 0.0
        %1239 = vmatpush2.msra.mxu0 0.0
        %1240 = vmatprep.subr.mxu0 0.0
        %1241 = vmatpush2.msra.mxu0 0.0
        %1242 = vmatprep.subr.mxu0 0.0
        %1243 = vmatpush2.msra.mxu0 0.0
        %1244 = vmatprep.subr.mxu0 0.0
        %1245 = vmatpush2.msra.mxu0 0.0
        %1246 = vmatprep.subr.mxu0 0.0
        %1247 = vmatpush2.msra.mxu0 0.0
        %1248 = vmatprep.subr.mxu0 0.0
        %1249 = vmatpush2.msra.mxu0 0.0
        %1250 = vmatprep.subr.mxu0 0.0
        %1251 = vmatpush2.msra.mxu0 0.0
        %1252 = vmatprep.subr.mxu0 0.0
        %1253 = vmatpush2.msra.mxu0 0.0
        %1254 = vmatprep.subr.mxu0 0.0
        %1255 = vmatpush2.msra.mxu0 0.0
        %1256 = vmatprep.subr.mxu0 0.0
        %1257 = vmatpush2.msra.mxu0 0.0
        %1258 = vmatprep.subr.mxu0 0.0
        %1259 = vmatpush2.msra.mxu0 0.0
        %1260 = vmatprep.mubr.f32.mxu0 0.0
        %1261 = vmatmul.mubr.f32.gmra.mxu0 %v1171
        %v1262 = vpop.f32.mrf.mxu0
        %v1263 = vadd.f32 0.0, %v1262
        %v1264 = vpop.f32.mrf.mxu0
        %1265 = vmatprep.mubr.f32.mxu0 0.0
        %1266 = vmatmul.mubr.f32.gmra.mxu0 %v1172
        %v1267 = vpop.f32.mrf.mxu0
        %v1268 = vadd.f32 0.0, %v1267
        %v1269 = vpop.f32.mrf.mxu0
        %1270 = vmatprep.mubr.f32.mxu0 0.0
        %1271 = vmatmul.mubr.f32.gmra.mxu0 %v1173
        %v1272 = vpop.f32.mrf.mxu0
        %v1273 = vadd.f32 0.0, %v1272
        %v1274 = vpop.f32.mrf.mxu0
        %1275 = vmatprep.mubr.f32.mxu0 0.0
        %1276 = vmatmul.mubr.f32.gmra.mxu0 %v1174
        %v1277 = vpop.f32.mrf.mxu0
        %v1278 = vadd.f32 0.0, %v1277
        %v1279 = vpop.f32.mrf.mxu0
        %1280 = vmatprep.mubr.f32.mxu0 0.0
        %1281 = vmatmul.mubr.f32.gmra.mxu0 %v1175
        %v1282 = vpop.f32.mrf.mxu0
        %v1283 = vadd.f32 0.0, %v1282
        %v1284 = vpop.f32.mrf.mxu0
        %1285 = vmatprep.mubr.f32.mxu0 0.0
        %1286 = vmatmul.mubr.f32.gmra.mxu0 %v1176
        %v1287 = vpop.f32.mrf.mxu0
        %v1288 = vadd.f32 0.0, %v1287
        %v1289 = vpop.f32.mrf.mxu0
        %1290 = vmatprep.mubr.f32.mxu0 0.0
        %1291 = vmatmul.mubr.f32.gmra.mxu0 %v1177
        %v1292 = vpop.f32.mrf.mxu0
        %v1293 = vadd.f32 0.0, %v1292
        %v1294 = vpop.f32.mrf.mxu0
        %1295 = vmatprep.mubr.f32.mxu0 0.0
        %1296 = vmatmul.mubr.f32.gmra.mxu0 %v1178
        %v1297 = vpop.f32.mrf.mxu0
        %v1298 = vadd.f32 0.0, %v1297
        %v1299 = vpop.f32.mrf.mxu0
        %1300 = vdwg.mxu0
        %v1301 = vadd.f32 %v1116, %v1263
        %v1302 = vadd.f32 %v1121, %v1268
        %v1303 = vadd.f32 %v1126, %v1273
        %v1304 = vadd.f32 %v1131, %v1278
        %v1305 = vadd.f32 %v1136, %v1283
        %v1306 = vadd.f32 %v1141, %v1288
        %v1307 = vadd.f32 %v1146, %v1293
        %v1308 = vadd.f32 %v1151, %v1298
        %v1310 = vrot.slane %v877, 7
        %v1312 = vsel %vm902, 0.0, %v1310
        %s1313 = scalar_lea.vmem [#allocation5], 384
        %v1314 = vld [vmem:[%s1313] sm:$0xff]
        %v1315 = vld [vmem:[%s1313 + $0x8] sm:$0xff]
        %v1316 = vld [vmem:[%s1313 + $0x10] sm:$0xff]
        %v1317 = vld [vmem:[%s1313 + $0x18] sm:$0xff]
        %v1318 = vld [vmem:[%s1313 + $0x20] sm:$0xff]
        %v1319 = vld [vmem:[%s1313 + $0x28] sm:$0xff]
        %v1320 = vld [vmem:[%s1313 + $0x30] sm:$0xff]
        %v1321 = vld [vmem:[%s1313 + $0x38] sm:$0xff]
        %v1322 = vld [vmem:[%s1313 + $0x40] sm:$0xff]
        %v1323 = vld [vmem:[%s1313 + $0x48] sm:$0xff]
        %v1324 = vld [vmem:[%s1313 + $0x50] sm:$0xff]
        %v1325 = vld [vmem:[%s1313 + $0x58] sm:$0xff]
        %v1326 = vld [vmem:[%s1313 + $0x60] sm:$0xff]
        %v1327 = vld [vmem:[%s1313 + $0x68] sm:$0xff]
        %v1328 = vld [vmem:[%s1313 + $0x70] sm:$0xff]
        %v1329 = vld [vmem:[%s1313 + $0x78] sm:$0xff]
        %1330 = vmatprep.subr.mxu0 0.0
        %1331 = vmatpush1.msra.mxu0 %v1329
        %1332 = vmatprep.subr.mxu0 0.0
        %1333 = vmatpush1.msra.mxu0 %v1328
        %1334 = vmatprep.subr.mxu0 0.0
        %1335 = vmatpush1.msra.mxu0 %v1327
        %1336 = vmatprep.subr.mxu0 0.0
        %1337 = vmatpush1.msra.mxu0 %v1326
        %1338 = vmatprep.subr.mxu0 0.0
        %1339 = vmatpush1.msra.mxu0 %v1325
        %1340 = vmatprep.subr.mxu0 0.0
        %1341 = vmatpush1.msra.mxu0 %v1324
        %1342 = vmatprep.subr.mxu0 0.0
        %1343 = vmatpush1.msra.mxu0 %v1323
        %1344 = vmatprep.subr.mxu0 0.0
        %1345 = vmatpush1.msra.mxu0 %v1322
        %1346 = vmatprep.subr.mxu0 0.0
        %1347 = vmatpush1.msra.mxu0 %v1321
        %1348 = vmatprep.subr.mxu0 0.0
        %1349 = vmatpush1.msra.mxu0 %v1320
        %1350 = vmatprep.subr.mxu0 0.0
        %1351 = vmatpush1.msra.mxu0 %v1319
        %1352 = vmatprep.subr.mxu0 0.0
        %1353 = vmatpush1.msra.mxu0 %v1318
        %1354 = vmatprep.subr.mxu0 0.0
        %1355 = vmatpush1.msra.mxu0 %v1317
        %1356 = vmatprep.subr.mxu0 0.0
        %1357 = vmatpush1.msra.mxu0 %v1316
        %1358 = vmatprep.subr.mxu0 0.0
        %1359 = vmatpush1.msra.mxu0 %v1315
        %1360 = vmatprep.subr.mxu0 0.0
        %1361 = vmatpush1.msra.mxu0 %v1314
        %1362 = vmatprep.subr.mxu0 0.0
        %1363 = vmatpush2.msra.mxu0 0.0
        %1364 = vmatprep.subr.mxu0 0.0
        %1365 = vmatpush2.msra.mxu0 0.0
        %1366 = vmatprep.subr.mxu0 0.0
        %1367 = vmatpush2.msra.mxu0 0.0
        %1368 = vmatprep.subr.mxu0 0.0
        %1369 = vmatpush2.msra.mxu0 0.0
        %1370 = vmatprep.subr.mxu0 0.0
        %1371 = vmatpush2.msra.mxu0 0.0
        %1372 = vmatprep.subr.mxu0 0.0
        %1373 = vmatpush2.msra.mxu0 0.0
        %1374 = vmatprep.subr.mxu0 0.0
        %1375 = vmatpush2.msra.mxu0 0.0
        %1376 = vmatprep.subr.mxu0 0.0
        %1377 = vmatpush2.msra.mxu0 0.0
        %1378 = vmatprep.subr.mxu0 0.0
        %1379 = vmatpush2.msra.mxu0 0.0
        %1380 = vmatprep.subr.mxu0 0.0
        %1381 = vmatpush2.msra.mxu0 0.0
        %1382 = vmatprep.subr.mxu0 0.0
        %1383 = vmatpush2.msra.mxu0 0.0
        %1384 = vmatprep.subr.mxu0 0.0
        %1385 = vmatpush2.msra.mxu0 0.0
        %1386 = vmatprep.subr.mxu0 0.0
        %1387 = vmatpush2.msra.mxu0 0.0
        %1388 = vmatprep.subr.mxu0 0.0
        %1389 = vmatpush2.msra.mxu0 0.0
        %1390 = vmatprep.subr.mxu0 0.0
        %1391 = vmatpush2.msra.mxu0 0.0
        %1392 = vmatprep.subr.mxu0 0.0
        %1393 = vmatpush2.msra.mxu0 0.0
        %1394 = vmatprep.mubr.f32.mxu0 0.0
        %1395 = vmatmul.mubr.f32.gmra.mxu0 %v904
        %v1396 = vpop.f32.mrf.mxu0
        %v1397 = vadd.f32 0.0, %v1396
        %v1398 = vpop.f32.mrf.mxu0
        %1399 = vmatprep.mubr.f32.mxu0 0.0
        %1400 = vmatmul.mubr.f32.gmra.mxu0 %v905
        %v1401 = vpop.f32.mrf.mxu0
        %v1402 = vadd.f32 0.0, %v1401
        %v1403 = vpop.f32.mrf.mxu0
        %1404 = vmatprep.mubr.f32.mxu0 0.0
        %1405 = vmatmul.mubr.f32.gmra.mxu0 %v906
        %v1406 = vpop.f32.mrf.mxu0
        %v1407 = vadd.f32 0.0, %v1406
        %v1408 = vpop.f32.mrf.mxu0
        %1409 = vmatprep.mubr.f32.mxu0 0.0
        %1410 = vmatmul.mubr.f32.gmra.mxu0 %v907
        %v1411 = vpop.f32.mrf.mxu0
        %v1412 = vadd.f32 0.0, %v1411
        %v1413 = vpop.f32.mrf.mxu0
        %1414 = vmatprep.mubr.f32.mxu0 0.0
        %1415 = vmatmul.mubr.f32.gmra.mxu0 %v908
        %v1416 = vpop.f32.mrf.mxu0
        %v1417 = vadd.f32 0.0, %v1416
        %v1418 = vpop.f32.mrf.mxu0
        %1419 = vmatprep.mubr.f32.mxu0 0.0
        %1420 = vmatmul.mubr.f32.gmra.mxu0 %v909
        %v1421 = vpop.f32.mrf.mxu0
        %v1422 = vadd.f32 0.0, %v1421
        %v1423 = vpop.f32.mrf.mxu0
        %1424 = vmatprep.mubr.f32.mxu0 0.0
        %1425 = vmatmul.mubr.f32.gmra.mxu0 %v910
        %v1426 = vpop.f32.mrf.mxu0
        %v1427 = vadd.f32 0.0, %v1426
        %v1428 = vpop.f32.mrf.mxu0
        %1429 = vmatprep.mubr.f32.mxu0 0.0
        %1430 = vmatmul.mubr.f32.gmra.mxu0 %v1312
        %v1431 = vpop.f32.mrf.mxu0
        %v1432 = vadd.f32 0.0, %v1431
        %v1433 = vpop.f32.mrf.mxu0
        %1434 = vdwg.mxu0
        %v1435 = vadd.f32 %v1301, %v1397
        %v1436 = vadd.f32 %v1302, %v1402
        %v1437 = vadd.f32 %v1303, %v1407
        %v1438 = vadd.f32 %v1304, %v1412
        %v1439 = vadd.f32 %v1305, %v1417
        %v1440 = vadd.f32 %v1306, %v1422
        %v1441 = vadd.f32 %v1307, %v1427
        %v1442 = vadd.f32 %v1308, %v1432
        %s1443 = scalar_lea.vmem [#allocation5], 512
        %v1444 = vld [vmem:[%s1443] sm:$0xff]
        %v1445 = vld [vmem:[%s1443 + $0x8] sm:$0xff]
        %v1446 = vld [vmem:[%s1443 + $0x10] sm:$0xff]
        %v1447 = vld [vmem:[%s1443 + $0x18] sm:$0xff]
        %v1448 = vld [vmem:[%s1443 + $0x20] sm:$0xff]
        %v1449 = vld [vmem:[%s1443 + $0x28] sm:$0xff]
        %v1450 = vld [vmem:[%s1443 + $0x30] sm:$0xff]
        %v1451 = vld [vmem:[%s1443 + $0x38] sm:$0xff]
        %v1452 = vld [vmem:[%s1443 + $0x40] sm:$0xff]
        %v1453 = vld [vmem:[%s1443 + $0x48] sm:$0xff]
        %v1454 = vld [vmem:[%s1443 + $0x50] sm:$0xff]
        %v1455 = vld [vmem:[%s1443 + $0x58] sm:$0xff]
        %v1456 = vld [vmem:[%s1443 + $0x60] sm:$0xff]
        %v1457 = vld [vmem:[%s1443 + $0x68] sm:$0xff]
        %v1458 = vld [vmem:[%s1443 + $0x70] sm:$0xff]
        %v1459 = vld [vmem:[%s1443 + $0x78] sm:$0xff]
        %1460 = vmatprep.subr.mxu0 0.0
        %1461 = vmatpush1.msra.mxu0 %v1459
        %1462 = vmatprep.subr.mxu0 0.0
        %1463 = vmatpush1.msra.mxu0 %v1458
        %1464 = vmatprep.subr.mxu0 0.0
        %1465 = vmatpush1.msra.mxu0 %v1457
        %1466 = vmatprep.subr.mxu0 0.0
        %1467 = vmatpush1.msra.mxu0 %v1456
        %1468 = vmatprep.subr.mxu0 0.0
        %1469 = vmatpush1.msra.mxu0 %v1455
        %1470 = vmatprep.subr.mxu0 0.0
        %1471 = vmatpush1.msra.mxu0 %v1454
        %1472 = vmatprep.subr.mxu0 0.0
        %1473 = vmatpush1.msra.mxu0 %v1453
        %1474 = vmatprep.subr.mxu0 0.0
        %1475 = vmatpush1.msra.mxu0 %v1452
        %1476 = vmatprep.subr.mxu0 0.0
        %1477 = vmatpush1.msra.mxu0 %v1451
        %1478 = vmatprep.subr.mxu0 0.0
        %1479 = vmatpush1.msra.mxu0 %v1450
        %1480 = vmatprep.subr.mxu0 0.0
        %1481 = vmatpush1.msra.mxu0 %v1449
        %1482 = vmatprep.subr.mxu0 0.0
        %1483 = vmatpush1.msra.mxu0 %v1448
        %1484 = vmatprep.subr.mxu0 0.0
        %1485 = vmatpush1.msra.mxu0 %v1447
        %1486 = vmatprep.subr.mxu0 0.0
        %1487 = vmatpush1.msra.mxu0 %v1446
        %1488 = vmatprep.subr.mxu0 0.0
        %1489 = vmatpush1.msra.mxu0 %v1445
        %1490 = vmatprep.subr.mxu0 0.0
        %1491 = vmatpush1.msra.mxu0 %v1444
        %1492 = vmatprep.subr.mxu0 0.0
        %1493 = vmatpush2.msra.mxu0 0.0
        %1494 = vmatprep.subr.mxu0 0.0
        %1495 = vmatpush2.msra.mxu0 0.0
        %1496 = vmatprep.subr.mxu0 0.0
        %1497 = vmatpush2.msra.mxu0 0.0
        %1498 = vmatprep.subr.mxu0 0.0
        %1499 = vmatpush2.msra.mxu0 0.0
        %1500 = vmatprep.subr.mxu0 0.0
        %1501 = vmatpush2.msra.mxu0 0.0
        %1502 = vmatprep.subr.mxu0 0.0
        %1503 = vmatpush2.msra.mxu0 0.0
        %1504 = vmatprep.subr.mxu0 0.0
        %1505 = vmatpush2.msra.mxu0 0.0
        %1506 = vmatprep.subr.mxu0 0.0
        %1507 = vmatpush2.msra.mxu0 0.0
        %1508 = vmatprep.subr.mxu0 0.0
        %1509 = vmatpush2.msra.mxu0 0.0
        %1510 = vmatprep.subr.mxu0 0.0
        %1511 = vmatpush2.msra.mxu0 0.0
        %1512 = vmatprep.subr.mxu0 0.0
        %1513 = vmatpush2.msra.mxu0 0.0
        %1514 = vmatprep.subr.mxu0 0.0
        %1515 = vmatpush2.msra.mxu0 0.0
        %1516 = vmatprep.subr.mxu0 0.0
        %1517 = vmatpush2.msra.mxu0 0.0
        %1518 = vmatprep.subr.mxu0 0.0
        %1519 = vmatpush2.msra.mxu0 0.0
        %1520 = vmatprep.subr.mxu0 0.0
        %1521 = vmatpush2.msra.mxu0 0.0
        %1522 = vmatprep.subr.mxu0 0.0
        %1523 = vmatpush2.msra.mxu0 0.0
        %1524 = vmatprep.mubr.f32.mxu0 0.0
        %1525 = vmatmul.mubr.f32.gmra.mxu0 %v870
        %v1526 = vpop.f32.mrf.mxu0
        %v1527 = vadd.f32 0.0, %v1526
        %v1528 = vpop.f32.mrf.mxu0
        %1529 = vmatprep.mubr.f32.mxu0 0.0
        %1530 = vmatmul.mubr.f32.gmra.mxu0 %v871
        %v1531 = vpop.f32.mrf.mxu0
        %v1532 = vadd.f32 0.0, %v1531
        %v1533 = vpop.f32.mrf.mxu0
        %1534 = vmatprep.mubr.f32.mxu0 0.0
        %1535 = vmatmul.mubr.f32.gmra.mxu0 %v872
        %v1536 = vpop.f32.mrf.mxu0
        %v1537 = vadd.f32 0.0, %v1536
        %v1538 = vpop.f32.mrf.mxu0
        %1539 = vmatprep.mubr.f32.mxu0 0.0
        %1540 = vmatmul.mubr.f32.gmra.mxu0 %v873
        %v1541 = vpop.f32.mrf.mxu0
        %v1542 = vadd.f32 0.0, %v1541
        %v1543 = vpop.f32.mrf.mxu0
        %1544 = vmatprep.mubr.f32.mxu0 0.0
        %1545 = vmatmul.mubr.f32.gmra.mxu0 %v874
        %v1546 = vpop.f32.mrf.mxu0
        %v1547 = vadd.f32 0.0, %v1546
        %v1548 = vpop.f32.mrf.mxu0
        %1549 = vmatprep.mubr.f32.mxu0 0.0
        %1550 = vmatmul.mubr.f32.gmra.mxu0 %v875
        %v1551 = vpop.f32.mrf.mxu0
        %v1552 = vadd.f32 0.0, %v1551
        %v1553 = vpop.f32.mrf.mxu0
        %1554 = vmatprep.mubr.f32.mxu0 0.0
        %1555 = vmatmul.mubr.f32.gmra.mxu0 %v876
        %v1556 = vpop.f32.mrf.mxu0
        %v1557 = vadd.f32 0.0, %v1556
        %v1558 = vpop.f32.mrf.mxu0
        %1559 = vmatprep.mubr.f32.mxu0 0.0
        %1560 = vmatmul.mubr.f32.gmra.mxu0 %v877
        %v1561 = vpop.f32.mrf.mxu0
        %v1562 = vadd.f32 0.0, %v1561
        %v1563 = vpop.f32.mrf.mxu0
        %1564 = vdwg.mxu0
        %v1565 = vadd.f32 %v1435, %v1527
        %v1566 = vadd.f32 %v1436, %v1532
        %v1567 = vadd.f32 %v1437, %v1537
        %v1568 = vadd.f32 %v1438, %v1542
        %v1569 = vadd.f32 %v1439, %v1547
        %v1570 = vadd.f32 %v1440, %v1552
        %v1571 = vadd.f32 %v1441, %v1557
        %v1572 = vadd.f32 %v1442, %v1562
        %v1573 = vrot.slane %v877, 1
        %v1575 = vsel %vm1170, %v1573, 0.0
        %s1576 = scalar_lea.vmem [#allocation5], 640
        %v1577 = vld [vmem:[%s1576] sm:$0xff]
        %v1578 = vld [vmem:[%s1576 + $0x8] sm:$0xff]
        %v1579 = vld [vmem:[%s1576 + $0x10] sm:$0xff]
        %v1580 = vld [vmem:[%s1576 + $0x18] sm:$0xff]
        %v1581 = vld [vmem:[%s1576 + $0x20] sm:$0xff]
        %v1582 = vld [vmem:[%s1576 + $0x28] sm:$0xff]
        %v1583 = vld [vmem:[%s1576 + $0x30] sm:$0xff]
        %v1584 = vld [vmem:[%s1576 + $0x38] sm:$0xff]
        %v1585 = vld [vmem:[%s1576 + $0x40] sm:$0xff]
        %v1586 = vld [vmem:[%s1576 + $0x48] sm:$0xff]
        %v1587 = vld [vmem:[%s1576 + $0x50] sm:$0xff]
        %v1588 = vld [vmem:[%s1576 + $0x58] sm:$0xff]
        %v1589 = vld [vmem:[%s1576 + $0x60] sm:$0xff]
        %v1590 = vld [vmem:[%s1576 + $0x68] sm:$0xff]
        %v1591 = vld [vmem:[%s1576 + $0x70] sm:$0xff]
        %v1592 = vld [vmem:[%s1576 + $0x78] sm:$0xff]
        %1593 = vmatprep.subr.mxu0 0.0
        %1594 = vmatpush1.msra.mxu0 %v1592
        %1595 = vmatprep.subr.mxu0 0.0
        %1596 = vmatpush1.msra.mxu0 %v1591
        %1597 = vmatprep.subr.mxu0 0.0
        %1598 = vmatpush1.msra.mxu0 %v1590
        %1599 = vmatprep.subr.mxu0 0.0
        %1600 = vmatpush1.msra.mxu0 %v1589
        %1601 = vmatprep.subr.mxu0 0.0
        %1602 = vmatpush1.msra.mxu0 %v1588
        %1603 = vmatprep.subr.mxu0 0.0
        %1604 = vmatpush1.msra.mxu0 %v1587
        %1605 = vmatprep.subr.mxu0 0.0
        %1606 = vmatpush1.msra.mxu0 %v1586
        %1607 = vmatprep.subr.mxu0 0.0
        %1608 = vmatpush1.msra.mxu0 %v1585
        %1609 = vmatprep.subr.mxu0 0.0
        %1610 = vmatpush1.msra.mxu0 %v1584
        %1611 = vmatprep.subr.mxu0 0.0
        %1612 = vmatpush1.msra.mxu0 %v1583
        %1613 = vmatprep.subr.mxu0 0.0
        %1614 = vmatpush1.msra.mxu0 %v1582
        %1615 = vmatprep.subr.mxu0 0.0
        %1616 = vmatpush1.msra.mxu0 %v1581
        %1617 = vmatprep.subr.mxu0 0.0
        %1618 = vmatpush1.msra.mxu0 %v1580
        %1619 = vmatprep.subr.mxu0 0.0
        %1620 = vmatpush1.msra.mxu0 %v1579
        %1621 = vmatprep.subr.mxu0 0.0
        %1622 = vmatpush1.msra.mxu0 %v1578
        %1623 = vmatprep.subr.mxu0 0.0
        %1624 = vmatpush1.msra.mxu0 %v1577
        %1625 = vmatprep.subr.mxu0 0.0
        %1626 = vmatpush2.msra.mxu0 0.0
        %1627 = vmatprep.subr.mxu0 0.0
        %1628 = vmatpush2.msra.mxu0 0.0
        %1629 = vmatprep.subr.mxu0 0.0
        %1630 = vmatpush2.msra.mxu0 0.0
        %1631 = vmatprep.subr.mxu0 0.0
        %1632 = vmatpush2.msra.mxu0 0.0
        %1633 = vmatprep.subr.mxu0 0.0
        %1634 = vmatpush2.msra.mxu0 0.0
        %1635 = vmatprep.subr.mxu0 0.0
        %1636 = vmatpush2.msra.mxu0 0.0
        %1637 = vmatprep.subr.mxu0 0.0
        %1638 = vmatpush2.msra.mxu0 0.0
        %1639 = vmatprep.subr.mxu0 0.0
        %1640 = vmatpush2.msra.mxu0 0.0
        %1641 = vmatprep.subr.mxu0 0.0
        %1642 = vmatpush2.msra.mxu0 0.0
        %1643 = vmatprep.subr.mxu0 0.0
        %1644 = vmatpush2.msra.mxu0 0.0
        %1645 = vmatprep.subr.mxu0 0.0
        %1646 = vmatpush2.msra.mxu0 0.0
        %1647 = vmatprep.subr.mxu0 0.0
        %1648 = vmatpush2.msra.mxu0 0.0
        %1649 = vmatprep.subr.mxu0 0.0
        %1650 = vmatpush2.msra.mxu0 0.0
        %1651 = vmatprep.subr.mxu0 0.0
        %1652 = vmatpush2.msra.mxu0 0.0
        %1653 = vmatprep.subr.mxu0 0.0
        %1654 = vmatpush2.msra.mxu0 0.0
        %1655 = vmatprep.subr.mxu0 0.0
        %1656 = vmatpush2.msra.mxu0 0.0
        %1657 = vmatprep.mubr.f32.mxu0 0.0
        %1658 = vmatmul.mubr.f32.gmra.mxu0 %v1172
        %v1659 = vpop.f32.mrf.mxu0
        %v1660 = vadd.f32 0.0, %v1659
        %v1661 = vpop.f32.mrf.mxu0
        %1662 = vmatprep.mubr.f32.mxu0 0.0
        %1663 = vmatmul.mubr.f32.gmra.mxu0 %v1173
        %v1664 = vpop.f32.mrf.mxu0
        %v1665 = vadd.f32 0.0, %v1664
        %v1666 = vpop.f32.mrf.mxu0
        %1667 = vmatprep.mubr.f32.mxu0 0.0
        %1668 = vmatmul.mubr.f32.gmra.mxu0 %v1174
        %v1669 = vpop.f32.mrf.mxu0
        %v1670 = vadd.f32 0.0, %v1669
        %v1671 = vpop.f32.mrf.mxu0
        %1672 = vmatprep.mubr.f32.mxu0 0.0
        %1673 = vmatmul.mubr.f32.gmra.mxu0 %v1175
        %v1674 = vpop.f32.mrf.mxu0
        %v1675 = vadd.f32 0.0, %v1674
        %v1676 = vpop.f32.mrf.mxu0
        %1677 = vmatprep.mubr.f32.mxu0 0.0
        %1678 = vmatmul.mubr.f32.gmra.mxu0 %v1176
        %v1679 = vpop.f32.mrf.mxu0
        %v1680 = vadd.f32 0.0, %v1679
        %v1681 = vpop.f32.mrf.mxu0
        %1682 = vmatprep.mubr.f32.mxu0 0.0
        %1683 = vmatmul.mubr.f32.gmra.mxu0 %v1177
        %v1684 = vpop.f32.mrf.mxu0
        %v1685 = vadd.f32 0.0, %v1684
        %v1686 = vpop.f32.mrf.mxu0
        %1687 = vmatprep.mubr.f32.mxu0 0.0
        %1688 = vmatmul.mubr.f32.gmra.mxu0 %v1178
        %v1689 = vpop.f32.mrf.mxu0
        %v1690 = vadd.f32 0.0, %v1689
        %v1691 = vpop.f32.mrf.mxu0
        %1692 = vmatprep.mubr.f32.mxu0 0.0
        %1693 = vmatmul.mubr.f32.gmra.mxu0 %v1575
        %v1694 = vpop.f32.mrf.mxu0
        %v1695 = vadd.f32 0.0, %v1694
        %v1696 = vpop.f32.mrf.mxu0
        %1697 = vdwg.mxu0
        %v1698 = vadd.f32 %v1565, %v1660
        %v1699 = vadd.f32 %v1566, %v1665
        %v1700 = vadd.f32 %v1567, %v1670
        %v1701 = vadd.f32 %v1568, %v1675
        %v1702 = vadd.f32 %v1569, %v1680
        %v1703 = vadd.f32 %v1570, %v1685
        %v1704 = vadd.f32 %v1571, %v1690
        %v1705 = vadd.f32 %v1572, %v1695
        %s1706 = scalar_lea.vmem [#allocation5], 768
        %v1707 = vld [vmem:[%s1706] sm:$0xff]
        %v1708 = vld [vmem:[%s1706 + $0x8] sm:$0xff]
        %v1709 = vld [vmem:[%s1706 + $0x10] sm:$0xff]
        %v1710 = vld [vmem:[%s1706 + $0x18] sm:$0xff]
        %v1711 = vld [vmem:[%s1706 + $0x20] sm:$0xff]
        %v1712 = vld [vmem:[%s1706 + $0x28] sm:$0xff]
        %v1713 = vld [vmem:[%s1706 + $0x30] sm:$0xff]
        %v1714 = vld [vmem:[%s1706 + $0x38] sm:$0xff]
        %v1715 = vld [vmem:[%s1706 + $0x40] sm:$0xff]
        %v1716 = vld [vmem:[%s1706 + $0x48] sm:$0xff]
        %v1717 = vld [vmem:[%s1706 + $0x50] sm:$0xff]
        %v1718 = vld [vmem:[%s1706 + $0x58] sm:$0xff]
        %v1719 = vld [vmem:[%s1706 + $0x60] sm:$0xff]
        %v1720 = vld [vmem:[%s1706 + $0x68] sm:$0xff]
        %v1721 = vld [vmem:[%s1706 + $0x70] sm:$0xff]
        %v1722 = vld [vmem:[%s1706 + $0x78] sm:$0xff]
        %1723 = vmatprep.subr.mxu0 0.0
        %1724 = vmatpush1.msra.mxu0 %v1722
        %1725 = vmatprep.subr.mxu0 0.0
        %1726 = vmatpush1.msra.mxu0 %v1721
        %1727 = vmatprep.subr.mxu0 0.0
        %1728 = vmatpush1.msra.mxu0 %v1720
        %1729 = vmatprep.subr.mxu0 0.0
        %1730 = vmatpush1.msra.mxu0 %v1719
        %1731 = vmatprep.subr.mxu0 0.0
        %1732 = vmatpush1.msra.mxu0 %v1718
        %1733 = vmatprep.subr.mxu0 0.0
        %1734 = vmatpush1.msra.mxu0 %v1717
        %1735 = vmatprep.subr.mxu0 0.0
        %1736 = vmatpush1.msra.mxu0 %v1716
        %1737 = vmatprep.subr.mxu0 0.0
        %1738 = vmatpush1.msra.mxu0 %v1715
        %1739 = vmatprep.subr.mxu0 0.0
        %1740 = vmatpush1.msra.mxu0 %v1714
        %1741 = vmatprep.subr.mxu0 0.0
        %1742 = vmatpush1.msra.mxu0 %v1713
        %1743 = vmatprep.subr.mxu0 0.0
        %1744 = vmatpush1.msra.mxu0 %v1712
        %1745 = vmatprep.subr.mxu0 0.0
        %1746 = vmatpush1.msra.mxu0 %v1711
        %1747 = vmatprep.subr.mxu0 0.0
        %1748 = vmatpush1.msra.mxu0 %v1710
        %1749 = vmatprep.subr.mxu0 0.0
        %1750 = vmatpush1.msra.mxu0 %v1709
        %1751 = vmatprep.subr.mxu0 0.0
        %1752 = vmatpush1.msra.mxu0 %v1708
        %1753 = vmatprep.subr.mxu0 0.0
        %1754 = vmatpush1.msra.mxu0 %v1707
        %1755 = vmatprep.subr.mxu0 0.0
        %1756 = vmatpush2.msra.mxu0 0.0
        %1757 = vmatprep.subr.mxu0 0.0
        %1758 = vmatpush2.msra.mxu0 0.0
        %1759 = vmatprep.subr.mxu0 0.0
        %1760 = vmatpush2.msra.mxu0 0.0
        %1761 = vmatprep.subr.mxu0 0.0
        %1762 = vmatpush2.msra.mxu0 0.0
        %1763 = vmatprep.subr.mxu0 0.0
        %1764 = vmatpush2.msra.mxu0 0.0
        %1765 = vmatprep.subr.mxu0 0.0
        %1766 = vmatpush2.msra.mxu0 0.0
        %1767 = vmatprep.subr.mxu0 0.0
        %1768 = vmatpush2.msra.mxu0 0.0
        %1769 = vmatprep.subr.mxu0 0.0
        %1770 = vmatpush2.msra.mxu0 0.0
        %1771 = vmatprep.subr.mxu0 0.0
        %1772 = vmatpush2.msra.mxu0 0.0
        %1773 = vmatprep.subr.mxu0 0.0
        %1774 = vmatpush2.msra.mxu0 0.0
        %1775 = vmatprep.subr.mxu0 0.0
        %1776 = vmatpush2.msra.mxu0 0.0
        %1777 = vmatprep.subr.mxu0 0.0
        %1778 = vmatpush2.msra.mxu0 0.0
        %1779 = vmatprep.subr.mxu0 0.0
        %1780 = vmatpush2.msra.mxu0 0.0
        %1781 = vmatprep.subr.mxu0 0.0
        %1782 = vmatpush2.msra.mxu0 0.0
        %1783 = vmatprep.subr.mxu0 0.0
        %1784 = vmatpush2.msra.mxu0 0.0
        %1785 = vmatprep.subr.mxu0 0.0
        %1786 = vmatpush2.msra.mxu0 0.0
        %1787 = vmatprep.mubr.f32.mxu0 0.0
        %1788 = vmatmul.mubr.f32.gmra.mxu0 %v905
        %v1789 = vpop.f32.mrf.mxu0
        %v1790 = vadd.f32 0.0, %v1789
        %v1791 = vpop.f32.mrf.mxu0
        %1792 = vmatprep.mubr.f32.mxu0 0.0
        %1793 = vmatmul.mubr.f32.gmra.mxu0 %v906
        %v1794 = vpop.f32.mrf.mxu0
        %v1795 = vadd.f32 0.0, %v1794
        %v1796 = vpop.f32.mrf.mxu0
        %1797 = vmatprep.mubr.f32.mxu0 0.0
        %1798 = vmatmul.mubr.f32.gmra.mxu0 %v907
        %v1799 = vpop.f32.mrf.mxu0
        %v1800 = vadd.f32 0.0, %v1799
        %v1801 = vpop.f32.mrf.mxu0
        %1802 = vmatprep.mubr.f32.mxu0 0.0
        %1803 = vmatmul.mubr.f32.gmra.mxu0 %v908
        %v1804 = vpop.f32.mrf.mxu0
        %v1805 = vadd.f32 0.0, %v1804
        %v1806 = vpop.f32.mrf.mxu0
        %1807 = vmatprep.mubr.f32.mxu0 0.0
        %1808 = vmatmul.mubr.f32.gmra.mxu0 %v909
        %v1809 = vpop.f32.mrf.mxu0
        %v1810 = vadd.f32 0.0, %v1809
        %v1811 = vpop.f32.mrf.mxu0
        %1812 = vmatprep.mubr.f32.mxu0 0.0
        %1813 = vmatmul.mubr.f32.gmra.mxu0 %v910
        %v1814 = vpop.f32.mrf.mxu0
        %v1815 = vadd.f32 0.0, %v1814
        %v1816 = vpop.f32.mrf.mxu0
        %1817 = vmatprep.mubr.f32.mxu0 0.0
        %1818 = vmatmul.mubr.f32.gmra.mxu0 %v1312
        %v1819 = vpop.f32.mrf.mxu0
        %v1820 = vadd.f32 0.0, %v1819
        %v1821 = vpop.f32.mrf.mxu0
        %1822 = vmatprep.mubr.f32.mxu0 0.0
        %1823 = vmatmul.mubr.f32.gmra.mxu0 %v903
        %v1824 = vpop.f32.mrf.mxu0
        %v1825 = vadd.f32 0.0, %v1824
        %v1826 = vpop.f32.mrf.mxu0
        %1827 = vdwg.mxu0
        %v1828 = vadd.f32 %v1698, %v1790
        %v1829 = vadd.f32 %v1699, %v1795
        %v1830 = vadd.f32 %v1700, %v1800
        %v1831 = vadd.f32 %v1701, %v1805
        %v1832 = vadd.f32 %v1702, %v1810
        %v1833 = vadd.f32 %v1703, %v1815
        %v1834 = vadd.f32 %v1704, %v1820
        %v1835 = vadd.f32 %v1705, %v1825
        %s1836 = scalar_lea.vmem [#allocation5], 896
        %v1837 = vld [vmem:[%s1836] sm:$0xff]
        %v1838 = vld [vmem:[%s1836 + $0x8] sm:$0xff]
        %v1839 = vld [vmem:[%s1836 + $0x10] sm:$0xff]
        %v1840 = vld [vmem:[%s1836 + $0x18] sm:$0xff]
        %v1841 = vld [vmem:[%s1836 + $0x20] sm:$0xff]
        %v1842 = vld [vmem:[%s1836 + $0x28] sm:$0xff]
        %v1843 = vld [vmem:[%s1836 + $0x30] sm:$0xff]
        %v1844 = vld [vmem:[%s1836 + $0x38] sm:$0xff]
        %v1845 = vld [vmem:[%s1836 + $0x40] sm:$0xff]
        %v1846 = vld [vmem:[%s1836 + $0x48] sm:$0xff]
        %v1847 = vld [vmem:[%s1836 + $0x50] sm:$0xff]
        %v1848 = vld [vmem:[%s1836 + $0x58] sm:$0xff]
        %v1849 = vld [vmem:[%s1836 + $0x60] sm:$0xff]
        %v1850 = vld [vmem:[%s1836 + $0x68] sm:$0xff]
        %v1851 = vld [vmem:[%s1836 + $0x70] sm:$0xff]
        %v1852 = vld [vmem:[%s1836 + $0x78] sm:$0xff]
        %1853 = vmatprep.subr.mxu0 0.0
        %1854 = vmatpush1.msra.mxu0 %v1852
        %1855 = vmatprep.subr.mxu0 0.0
        %1856 = vmatpush1.msra.mxu0 %v1851
        %1857 = vmatprep.subr.mxu0 0.0
        %1858 = vmatpush1.msra.mxu0 %v1850
        %1859 = vmatprep.subr.mxu0 0.0
        %1860 = vmatpush1.msra.mxu0 %v1849
        %1861 = vmatprep.subr.mxu0 0.0
        %1862 = vmatpush1.msra.mxu0 %v1848
        %1863 = vmatprep.subr.mxu0 0.0
        %1864 = vmatpush1.msra.mxu0 %v1847
        %1865 = vmatprep.subr.mxu0 0.0
        %1866 = vmatpush1.msra.mxu0 %v1846
        %1867 = vmatprep.subr.mxu0 0.0
        %1868 = vmatpush1.msra.mxu0 %v1845
        %1869 = vmatprep.subr.mxu0 0.0
        %1870 = vmatpush1.msra.mxu0 %v1844
        %1871 = vmatprep.subr.mxu0 0.0
        %1872 = vmatpush1.msra.mxu0 %v1843
        %1873 = vmatprep.subr.mxu0 0.0
        %1874 = vmatpush1.msra.mxu0 %v1842
        %1875 = vmatprep.subr.mxu0 0.0
        %1876 = vmatpush1.msra.mxu0 %v1841
        %1877 = vmatprep.subr.mxu0 0.0
        %1878 = vmatpush1.msra.mxu0 %v1840
        %1879 = vmatprep.subr.mxu0 0.0
        %1880 = vmatpush1.msra.mxu0 %v1839
        %1881 = vmatprep.subr.mxu0 0.0
        %1882 = vmatpush1.msra.mxu0 %v1838
        %1883 = vmatprep.subr.mxu0 0.0
        %1884 = vmatpush1.msra.mxu0 %v1837
        %1885 = vmatprep.subr.mxu0 0.0
        %1886 = vmatpush2.msra.mxu0 0.0
        %1887 = vmatprep.subr.mxu0 0.0
        %1888 = vmatpush2.msra.mxu0 0.0
        %1889 = vmatprep.subr.mxu0 0.0
        %1890 = vmatpush2.msra.mxu0 0.0
        %1891 = vmatprep.subr.mxu0 0.0
        %1892 = vmatpush2.msra.mxu0 0.0
        %1893 = vmatprep.subr.mxu0 0.0
        %1894 = vmatpush2.msra.mxu0 0.0
        %1895 = vmatprep.subr.mxu0 0.0
        %1896 = vmatpush2.msra.mxu0 0.0
        %1897 = vmatprep.subr.mxu0 0.0
        %1898 = vmatpush2.msra.mxu0 0.0
        %1899 = vmatprep.subr.mxu0 0.0
        %1900 = vmatpush2.msra.mxu0 0.0
        %1901 = vmatprep.subr.mxu0 0.0
        %1902 = vmatpush2.msra.mxu0 0.0
        %1903 = vmatprep.subr.mxu0 0.0
        %1904 = vmatpush2.msra.mxu0 0.0
        %1905 = vmatprep.subr.mxu0 0.0
        %1906 = vmatpush2.msra.mxu0 0.0
        %1907 = vmatprep.subr.mxu0 0.0
        %1908 = vmatpush2.msra.mxu0 0.0
        %1909 = vmatprep.subr.mxu0 0.0
        %1910 = vmatpush2.msra.mxu0 0.0
        %1911 = vmatprep.subr.mxu0 0.0
        %1912 = vmatpush2.msra.mxu0 0.0
        %1913 = vmatprep.subr.mxu0 0.0
        %1914 = vmatpush2.msra.mxu0 0.0
        %1915 = vmatprep.subr.mxu0 0.0
        %1916 = vmatpush2.msra.mxu0 0.0
        %1917 = vmatprep.mubr.f32.mxu0 0.0
        %1918 = vmatmul.mubr.f32.gmra.mxu0 %v871
        %v1919 = vpop.f32.mrf.mxu0
        %v1920 = vadd.f32 0.0, %v1919
        %v1921 = vpop.f32.mrf.mxu0
        %1922 = vmatprep.mubr.f32.mxu0 0.0
        %1923 = vmatmul.mubr.f32.gmra.mxu0 %v872
        %v1924 = vpop.f32.mrf.mxu0
        %v1925 = vadd.f32 0.0, %v1924
        %v1926 = vpop.f32.mrf.mxu0
        %1927 = vmatprep.mubr.f32.mxu0 0.0
        %1928 = vmatmul.mubr.f32.gmra.mxu0 %v873
        %v1929 = vpop.f32.mrf.mxu0
        %v1930 = vadd.f32 0.0, %v1929
        %v1931 = vpop.f32.mrf.mxu0
        %1932 = vmatprep.mubr.f32.mxu0 0.0
        %1933 = vmatmul.mubr.f32.gmra.mxu0 %v874
        %v1934 = vpop.f32.mrf.mxu0
        %v1935 = vadd.f32 0.0, %v1934
        %v1936 = vpop.f32.mrf.mxu0
        %1937 = vmatprep.mubr.f32.mxu0 0.0
        %1938 = vmatmul.mubr.f32.gmra.mxu0 %v875
        %v1939 = vpop.f32.mrf.mxu0
        %v1940 = vadd.f32 0.0, %v1939
        %v1941 = vpop.f32.mrf.mxu0
        %1942 = vmatprep.mubr.f32.mxu0 0.0
        %1943 = vmatmul.mubr.f32.gmra.mxu0 %v876
        %v1944 = vpop.f32.mrf.mxu0
        %v1945 = vadd.f32 0.0, %v1944
        %v1946 = vpop.f32.mrf.mxu0
        %1947 = vmatprep.mubr.f32.mxu0 0.0
        %1948 = vmatmul.mubr.f32.gmra.mxu0 %v877
        %v1949 = vpop.f32.mrf.mxu0
        %v1950 = vadd.f32 0.0, %v1949
        %v1951 = vpop.f32.mrf.mxu0
        %1952 = vmatprep.mubr.f32.mxu0 0.0
        %1953 = vmatmul.mubr.f32.gmra.mxu0 0.0
        %v1954 = vpop.f32.mrf.mxu0
        %v1955 = vadd.f32 0.0, %v1954
        %v1956 = vpop.f32.mrf.mxu0
        %1957 = vdwg.mxu0
        %v1958 = vadd.f32 %v1828, %v1920
        %v1959 = vadd.f32 %v1829, %v1925
        %v1960 = vadd.f32 %v1830, %v1930
        %v1961 = vadd.f32 %v1831, %v1935
        %v1962 = vadd.f32 %v1832, %v1940
        %v1963 = vadd.f32 %v1833, %v1945
        %v1964 = vadd.f32 %v1834, %v1950
        %v1965 = vadd.f32 %v1835, %v1955
        %s1966 = scalar_lea.vmem [#allocation5], 1024
        %v1967 = vld [vmem:[%s1966] sm:$0xff]
        %v1968 = vld [vmem:[%s1966 + $0x8] sm:$0xff]
        %v1969 = vld [vmem:[%s1966 + $0x10] sm:$0xff]
        %v1970 = vld [vmem:[%s1966 + $0x18] sm:$0xff]
        %v1971 = vld [vmem:[%s1966 + $0x20] sm:$0xff]
        %v1972 = vld [vmem:[%s1966 + $0x28] sm:$0xff]
        %v1973 = vld [vmem:[%s1966 + $0x30] sm:$0xff]
        %v1974 = vld [vmem:[%s1966 + $0x38] sm:$0xff]
        %v1975 = vld [vmem:[%s1966 + $0x40] sm:$0xff]
        %v1976 = vld [vmem:[%s1966 + $0x48] sm:$0xff]
        %v1977 = vld [vmem:[%s1966 + $0x50] sm:$0xff]
        %v1978 = vld [vmem:[%s1966 + $0x58] sm:$0xff]
        %v1979 = vld [vmem:[%s1966 + $0x60] sm:$0xff]
        %v1980 = vld [vmem:[%s1966 + $0x68] sm:$0xff]
        %v1981 = vld [vmem:[%s1966 + $0x70] sm:$0xff]
        %v1982 = vld [vmem:[%s1966 + $0x78] sm:$0xff]
        %1983 = vmatprep.subr.mxu0 0.0
        %1984 = vmatpush1.msra.mxu0 %v1982
        %1985 = vmatprep.subr.mxu0 0.0
        %1986 = vmatpush1.msra.mxu0 %v1981
        %1987 = vmatprep.subr.mxu0 0.0
        %1988 = vmatpush1.msra.mxu0 %v1980
        %1989 = vmatprep.subr.mxu0 0.0
        %1990 = vmatpush1.msra.mxu0 %v1979
        %1991 = vmatprep.subr.mxu0 0.0
        %1992 = vmatpush1.msra.mxu0 %v1978
        %1993 = vmatprep.subr.mxu0 0.0
        %1994 = vmatpush1.msra.mxu0 %v1977
        %1995 = vmatprep.subr.mxu0 0.0
        %1996 = vmatpush1.msra.mxu0 %v1976
        %1997 = vmatprep.subr.mxu0 0.0
        %1998 = vmatpush1.msra.mxu0 %v1975
        %1999 = vmatprep.subr.mxu0 0.0
        %2000 = vmatpush1.msra.mxu0 %v1974
        %2001 = vmatprep.subr.mxu0 0.0
        %2002 = vmatpush1.msra.mxu0 %v1973
        %2003 = vmatprep.subr.mxu0 0.0
        %2004 = vmatpush1.msra.mxu0 %v1972
        %2005 = vmatprep.subr.mxu0 0.0
        %2006 = vmatpush1.msra.mxu0 %v1971
        %2007 = vmatprep.subr.mxu0 0.0
        %2008 = vmatpush1.msra.mxu0 %v1970
        %2009 = vmatprep.subr.mxu0 0.0
        %2010 = vmatpush1.msra.mxu0 %v1969
        %2011 = vmatprep.subr.mxu0 0.0
        %2012 = vmatpush1.msra.mxu0 %v1968
        %2013 = vmatprep.subr.mxu0 0.0
        %2014 = vmatpush1.msra.mxu0 %v1967
        %2015 = vmatprep.subr.mxu0 0.0
        %2016 = vmatpush2.msra.mxu0 0.0
        %2017 = vmatprep.subr.mxu0 0.0
        %2018 = vmatpush2.msra.mxu0 0.0
        %2019 = vmatprep.subr.mxu0 0.0
        %2020 = vmatpush2.msra.mxu0 0.0
        %2021 = vmatprep.subr.mxu0 0.0
        %2022 = vmatpush2.msra.mxu0 0.0
        %2023 = vmatprep.subr.mxu0 0.0
        %2024 = vmatpush2.msra.mxu0 0.0
        %2025 = vmatprep.subr.mxu0 0.0
        %2026 = vmatpush2.msra.mxu0 0.0
        %2027 = vmatprep.subr.mxu0 0.0
        %2028 = vmatpush2.msra.mxu0 0.0
        %2029 = vmatprep.subr.mxu0 0.0
        %2030 = vmatpush2.msra.mxu0 0.0
        %2031 = vmatprep.subr.mxu0 0.0
        %2032 = vmatpush2.msra.mxu0 0.0
        %2033 = vmatprep.subr.mxu0 0.0
        %2034 = vmatpush2.msra.mxu0 0.0
        %2035 = vmatprep.subr.mxu0 0.0
        %2036 = vmatpush2.msra.mxu0 0.0
        %2037 = vmatprep.subr.mxu0 0.0
        %2038 = vmatpush2.msra.mxu0 0.0
        %2039 = vmatprep.subr.mxu0 0.0
        %2040 = vmatpush2.msra.mxu0 0.0
        %2041 = vmatprep.subr.mxu0 0.0
        %2042 = vmatpush2.msra.mxu0 0.0
        %2043 = vmatprep.subr.mxu0 0.0
        %2044 = vmatpush2.msra.mxu0 0.0
        %2045 = vmatprep.subr.mxu0 0.0
        %2046 = vmatpush2.msra.mxu0 0.0
        %2047 = vmatprep.mubr.f32.mxu0 0.0
        %2048 = vmatmul.mubr.f32.gmra.mxu0 %v1173
        %v2049 = vpop.f32.mrf.mxu0
        %v2050 = vadd.f32 0.0, %v2049
        %v2051 = vpop.f32.mrf.mxu0
        %2052 = vmatprep.mubr.f32.mxu0 0.0
        %2053 = vmatmul.mubr.f32.gmra.mxu0 %v1174
        %v2054 = vpop.f32.mrf.mxu0
        %v2055 = vadd.f32 0.0, %v2054
        %v2056 = vpop.f32.mrf.mxu0
        %2057 = vmatprep.mubr.f32.mxu0 0.0
        %2058 = vmatmul.mubr.f32.gmra.mxu0 %v1175
        %v2059 = vpop.f32.mrf.mxu0
        %v2060 = vadd.f32 0.0, %v2059
        %v2061 = vpop.f32.mrf.mxu0
        %2062 = vmatprep.mubr.f32.mxu0 0.0
        %2063 = vmatmul.mubr.f32.gmra.mxu0 %v1176
        %v2064 = vpop.f32.mrf.mxu0
        %v2065 = vadd.f32 0.0, %v2064
        %v2066 = vpop.f32.mrf.mxu0
        %2067 = vmatprep.mubr.f32.mxu0 0.0
        %2068 = vmatmul.mubr.f32.gmra.mxu0 %v1177
        %v2069 = vpop.f32.mrf.mxu0
        %v2070 = vadd.f32 0.0, %v2069
        %v2071 = vpop.f32.mrf.mxu0
        %2072 = vmatprep.mubr.f32.mxu0 0.0
        %2073 = vmatmul.mubr.f32.gmra.mxu0 %v1178
        %v2074 = vpop.f32.mrf.mxu0
        %v2075 = vadd.f32 0.0, %v2074
        %v2076 = vpop.f32.mrf.mxu0
        %2077 = vmatprep.mubr.f32.mxu0 0.0
        %2078 = vmatmul.mubr.f32.gmra.mxu0 %v1575
        %v2079 = vpop.f32.mrf.mxu0
        %v2080 = vadd.f32 0.0, %v2079
        %v2081 = vpop.f32.mrf.mxu0
        %2082 = vmatprep.mubr.f32.mxu0 0.0
        %2083 = vmatmul.mubr.f32.gmra.mxu0 %v1171
        %v2084 = vpop.f32.mrf.mxu0
        %v2085 = vadd.f32 0.0, %v2084
        %v2086 = vpop.f32.mrf.mxu0
        %2087 = vdwg.mxu0
        %v2088 = vadd.f32 %v1958, %v2050
        %v2089 = vadd.f32 %v1959, %v2055
        %v2090 = vadd.f32 %v1960, %v2060
        %v2091 = vadd.f32 %v1961, %v2065
        %v2092 = vadd.f32 %v1962, %v2070
        %v2093 = vadd.f32 %v1963, %v2075
        %v2094 = vadd.f32 %v1964, %v2080
        %v2095 = vadd.f32 %v1965, %v2085
        %v2096 = vld [vmem:[%s6] sm:$0x1]
        %v2098 = vlaneseq
        %v2099 = vshrl.u32 %v2098, 7
        %v2100 = vsub.s32 0, %v2099
        %v2101 = vrot.slane %v2096, %v2100
        %v2103 = vadd.f32 %v2088, %v2101
        %v2104 = vadd.f32 %v2089, %v2101
        %v2105 = vadd.f32 %v2090, %v2101
        %v2106 = vadd.f32 %v2091, %v2101
        %v2107 = vadd.f32 %v2092, %v2101
        %v2108 = vadd.f32 %v2093, %v2101
        %v2109 = vadd.f32 %v2094, %v2101
        %v2110 = vadd.f32 %v2095, %v2101
        %v2111 = vld [vmem:[%s413] sm:$0x1]
        %v2112 = vld [vmem:[#allocation7] sm:$0xff]
        %v2113 = vld [vmem:[#allocation7 + $0x8] sm:$0xff]
        %v2114 = vld [vmem:[%s9] sm:$0x1]
        %vm2115 = vcmask 130048
        %v2117 = vsel %vm2115, %v2111, 0
        %2119 = vmatprep.subr.mxu0 0.0
        %2120 = vmatpush1.msra.mxu0 0.0
        %2121 = vmatprep.subr.mxu0 0.0
        %2122 = vmatpush1.msra.mxu0 0.0
        %2123 = vmatprep.subr.mxu0 0.0
        %2124 = vmatpush1.msra.mxu0 0.0
        %2125 = vmatprep.subr.mxu0 0.0
        %2126 = vmatpush1.msra.mxu0 0.0
        %2127 = vmatprep.subr.mxu0 0.0
        %2128 = vmatpush1.msra.mxu0 0.0
        %2129 = vmatprep.subr.mxu0 0.0
        %2130 = vmatpush1.msra.mxu0 0.0
        %2131 = vmatprep.subr.mxu0 0.0
        %2132 = vmatpush1.msra.mxu0 0.0
        %2133 = vmatprep.subr.mxu0 0.0
        %2134 = vmatpush1.msra.mxu0 0.0
        %2135 = vmatprep.subr.mxu0 0.0
        %2136 = vmatpush1.msra.mxu0 0.0
        %2137 = vmatprep.subr.mxu0 0.0
        %2138 = vmatpush1.msra.mxu0 0.0
        %2139 = vmatprep.subr.mxu0 0.0
        %2140 = vmatpush1.msra.mxu0 0.0
        %2141 = vmatprep.subr.mxu0 0.0
        %2142 = vmatpush1.msra.mxu0 0.0
        %2143 = vmatprep.subr.mxu0 0.0
        %2144 = vmatpush1.msra.mxu0 0.0
        %2145 = vmatprep.subr.mxu0 0.0
        %2146 = vmatpush1.msra.mxu0 0.0
        %2147 = vmatprep.subr.mxu0 0.0
        %2148 = vmatpush1.msra.mxu0 %v2113
        %2149 = vmatprep.subr.mxu0 0.0
        %2150 = vmatpush1.msra.mxu0 %v2112
        %2151 = vmatprep.subr.mxu0 0.0
        %2152 = vmatpush2.msra.mxu0 0.0
        %2153 = vmatprep.subr.mxu0 0.0
        %2154 = vmatpush2.msra.mxu0 0.0
        %2155 = vmatprep.subr.mxu0 0.0
        %2156 = vmatpush2.msra.mxu0 0.0
        %2157 = vmatprep.subr.mxu0 0.0
        %2158 = vmatpush2.msra.mxu0 0.0
        %2159 = vmatprep.subr.mxu0 0.0
        %2160 = vmatpush2.msra.mxu0 0.0
        %2161 = vmatprep.subr.mxu0 0.0
        %2162 = vmatpush2.msra.mxu0 0.0
        %2163 = vmatprep.subr.mxu0 0.0
        %2164 = vmatpush2.msra.mxu0 0.0
        %2165 = vmatprep.subr.mxu0 0.0
        %2166 = vmatpush2.msra.mxu0 0.0
        %2167 = vmatprep.subr.mxu0 0.0
        %2168 = vmatpush2.msra.mxu0 0.0
        %2169 = vmatprep.subr.mxu0 0.0
        %2170 = vmatpush2.msra.mxu0 0.0
        %2171 = vmatprep.subr.mxu0 0.0
        %2172 = vmatpush2.msra.mxu0 0.0
        %2173 = vmatprep.subr.mxu0 0.0
        %2174 = vmatpush2.msra.mxu0 0.0
        %2175 = vmatprep.subr.mxu0 0.0
        %2176 = vmatpush2.msra.mxu0 0.0
        %2177 = vmatprep.subr.mxu0 0.0
        %2178 = vmatpush2.msra.mxu0 0.0
        %2179 = vmatprep.subr.mxu0 0.0
        %2180 = vmatpush2.msra.mxu0 0.0
        %2181 = vmatprep.subr.mxu0 0.0
        %2182 = vmatpush2.msra.mxu0 0.0
        %2183 = vmatprep.mubr.f32.mxu0 0.0
        %2184 = vmatmul.mubr.f32.gmra.mxu0 %v2117
        %v2185 = vpop.f32.mrf.mxu0
        %v2186 = vadd.f32 %v2114, %v2185
        %v2187 = vpop.f32.mrf.mxu0
        %2188 = vdwg.mxu0
        %v2189 = vlaneseq
        %v2190 = vshrl.u32 %v2189, 7
        %v2191 = vsub.s32 0, %v2190
        %v2192 = vrot.slane %v2186, %v2191
        %v2193 = vadd.f32 %v2103, %v2192
        %v2194 = vadd.f32 %v2104, %v2192
        %v2195 = vadd.f32 %v2105, %v2192
        %v2196 = vadd.f32 %v2106, %v2192
        %v2197 = vadd.f32 %v2107, %v2192
        %v2198 = vadd.f32 %v2108, %v2192
        %v2199 = vadd.f32 %v2109, %v2192
        %v2200 = vadd.f32 %v2110, %v2192
        %2201 = vst [vmem:[%s405] sm:$0xff] %v2193
        %2202 = vst [vmem:[%s405 + $0x8] sm:$0xff] %v2194
        %2203 = vst [vmem:[%s405 + $0x10] sm:$0xff] %v2195
        %2204 = vst [vmem:[%s405 + $0x18] sm:$0xff] %v2196
        %2205 = vst [vmem:[%s405 + $0x20] sm:$0xff] %v2197
        %2206 = vst [vmem:[%s405 + $0x28] sm:$0xff] %v2198
        %2207 = vst [vmem:[%s405 + $0x30] sm:$0xff] %v2199
        %2208 = vst [vmem:[%s405 + $0x38] sm:$0xff] %v2200
        %s2209 = sand.u32 %s254, 1
        %s2210 = scalar_lea.sflag [#allocation4], %s2209
        %s2211 = sand.u32 %s254, 1
        %s2212 = smul.addr %s2211, 64
        %s2213 = scalar_lea.vmem [#allocation8], %s2212
        // Predicated region
        $region73: #{tpu_custom_call.1} parent=59 // pred_check
          %p2214 = pneg %p264
        $region74: #{tpu_custom_call.1} parent=59 // pred_check_branch
          %2216 = sbr.rel (%p2214) target = $region76
        $region75: #{tpu_custom_call.1} parent=59 // pred_region
          %s2218 = ssub.s32 1024, 1024
          %2219 = vsyncadd %s2210, %s2218
          %s2220 = smul.addr %s26, 8
          %s2221 = smul.addr %s2220, 128
          %s2222 = scalar_lea.hbm %s10, %s2221
          %s2223 = sshll.u32 %s2213, 4
          %s2224 = int_to_ptr.vmem [resolvable:$true] %s2223
          %2229 = dma.vmem_to_hbm [thread:$0]  %s2224, 1024, %s2222, %s2210, 128, 128, 8
        $region76: #{tpu_custom_call.1} parent=59 // pred_fallthru
          _
      $region60: #{tpu_custom_call.1} parent=5 // pred_fallthru
        _
      %p2230 = scmp.le.s32.totalorder 2, %s21
      // Predicated region
      $region77: #{tpu_custom_call.1} parent=5 // pred_check
        %p2231 = pneg %p2230
      $region78: #{tpu_custom_call.1} parent=5 // pred_check_branch
        %2233 = sbr.rel (%p2231) target = $region80
      $region79: #{tpu_custom_call.1} parent=5 // pred_region
        %s2234 = ssub.s32 %s21, 2
        // Predicated region
        $region81: #{tpu_custom_call.1} parent=79 // pred_check
          %p2235 = pneg %p270
        $region82: #{tpu_custom_call.1} parent=79 // pred_check_branch
          %2237 = sbr.rel (%p2235) target = $region84
        $region83: #{tpu_custom_call.1} parent=79 // pred_region
          %s2238 = sand.u32 %s255, 1
          %s2239 = scalar_lea.sflag [#allocation4], %s2238
          %s2240 = sand.u32 %s255, 1
          %s2241 = smul.addr %s2240, 64
          %s2242 = scalar_lea.vmem [#allocation8], %s2241
          %2243 = dma.done %s2239, 1024
        $region84: #{tpu_custom_call.1} parent=79 // pred_fallthru
          _
      $region80: #{tpu_custom_call.1} parent=5 // pred_fallthru
        _
    $region6: #{tpu_custom_call.1} parent=1 // loop_footer
      %s25 = sadd.s32 1, %s21
    $region7: #{tpu_custom_call.1} parent=1 // loop_footer_branch
      %20 = sbr.rel target = $region3
    $region8: #{tpu_custom_call.1} parent=1 // loop_exit
      _
    %2244 = vsyncpa [#allocation3], 1
    %s2245 = scalar_lea.sflag [#allocation3], 1
    %2246 = vsyncpa %s2245, 1
    %2247 = vsyncpa [#allocation6], 1
    %2248 = vsyncpa [#allocation4], 1
    %s2249 = scalar_lea.sflag [#allocation4], 1
    %2250 = vsyncpa %s2249, 1

</llo_original>
